<compile_context>
chip_gen: v7x
topology: tpu7x:2x2x1
jax: 0.10.0
libtpu: 0.0.40
codegen_flags: <defaults>
</compile_context>

<pallas_src>
import functools

import jax
import jax.numpy as jnp
from jax.experimental import pallas as pl
from jax.experimental.pallas import tpu as pltpu


def _round_up(x, m):
    return (x + m - 1) // m * m


# ----------------------------------------------------------------------------
# Kernel 1: conv (7 row-tap bf16 MXU matmuls, f32 register-chunked accumulate)
# + bias + ELU, fused with per-sample per-channel sum / sum-of-squares partial
# reductions.  One grid step == one sample; every output block is indexed by
# the sample id, so the grid axis is safely "parallel".
# ----------------------------------------------------------------------------
def _conv_elu_stats_kernel(xeo_ref, w_ref, b_ref, y_ref, sum_ref, sq_ref, *,
                           ho, wo, chunk_rows):
    k = w_ref.shape[1]            # 7 * Cin (width taps folded into K)
    c8 = w_ref.shape[2]           # Cout padded to a multiple of 8 (sublane)

    s_tot = jnp.zeros((1, c8), jnp.float32)
    q_tot = jnp.zeros((1, c8), jnp.float32)

    # Static (unrolled) chunk loop over output rows: the f32 accumulator of
    # each chunk stays in vregs instead of being a full-size VMEM RMW buffer.
    for r0 in range(0, ho, chunk_rows):
        rows = min(chunk_rows, ho - r0)
        lm = rows * wo

        # accumulator initialised with the conv bias (ELU precedes BN, so the
        # bias cannot be folded into the BN shift).
        acc = jnp.broadcast_to(b_ref[...], (lm, c8)).astype(jnp.float32)

        # stride-2 conv: output row r reads padded-input row 2*r + ki.
        for a in range(4):        # even kernel-height taps ki = 2a
            lhs = xeo_ref[0, 0, r0 + a:r0 + a + rows, :, :].reshape(lm, k)
            acc = acc + jnp.dot(lhs, w_ref[2 * a],
                                preferred_element_type=jnp.float32)
        for a in range(3):        # odd kernel-height taps ki = 2a + 1
            lhs = xeo_ref[0, 1, r0 + a:r0 + a + rows, :, :].reshape(lm, k)
            acc = acc + jnp.dot(lhs, w_ref[2 * a + 1],
                                preferred_element_type=jnp.float32)

        # ELU(alpha=1).  exp(min(x,0))-1 kept (instead of expm1) for guaranteed
        # Mosaic lowering; the difference is far below the bf16 stream's ulp.
        y = jnp.where(acc > 0, acc, jnp.exp(jnp.minimum(acc, 0.0)) - 1.0)

        y_q = y.astype(jnp.bfloat16)        # bf16 activation stream (opt 1)
        y_f = y_q.astype(jnp.float32)       # stats on exactly what kernel 2 sees
        s_tot = s_tot + jnp.sum(y_f, axis=0, keepdims=True)
        q_tot = q_tot + jnp.sum(y_f * y_f, axis=0, keepdims=True)

        y_ref[0, pl.ds(r0 * wo, lm), :] = y_q

    sum_ref[...] = s_tot.reshape(1, 1, c8)
    sq_ref[...] = q_tot.reshape(1, 1, c8)


# ----------------------------------------------------------------------------
# Kernel 2: streaming fused BatchNorm affine + Dropout2d scaling (per-sample
# scale/shift already carry the channel-dropout keep factor).
# ----------------------------------------------------------------------------
def _bn_dropout_kernel(y_ref, scale_ref, shift_ref, out_ref):
    out_ref[...] = (y_ref[...].astype(jnp.float32) * scale_ref[...]
                    + shift_ref[...])


@functools.partial(jax.jit, static_argnames=("eps",))
def conv_block_forward(x_nchw, weight, bias, gamma, beta, drop_mask=None, *,
                       eps=1e-5):
    """ConvBlock forward (dim=2): Conv2d(k=7,s=2,p=3) -> ELU -> BatchNorm2d
    (training batch stats) -> Dropout2d (mask supplied, already 1/(1-p) scaled).

    x_nchw : (N, Cin, H, W) f32 | weight : (Cout, Cin, 7, 7) f32 (OIHW)
    bias, gamma, beta : (Cout,) f32 | drop_mask : (N, Cout) f32 or None
    returns (N, Cout, Ho, Wo) f32
    """
    n, cin, h, w = x_nchw.shape
    cout, _, kh, kw = weight.shape
    assert (kh, kw) == (7, 7)
    ho = (h + 2 * 3 - 7) // 2 + 1
    wo = (w + 2 * 3 - 7) // 2 + 1
    m = ho * wo
    k = kw * cin
    he = ho + 3                        # rows of the even/odd slabs
    c8 = _round_up(cout, 8)            # sublane-only channel padding (no x128)

    # ---- glue: cheap layout plumbing in plain JAX (no 49*Cin im2col) --------
    x_nhwc = jnp.transpose(x_nchw, (0, 2, 3, 1))
    xpad = jnp.pad(x_nhwc, ((0, 0), (3, 3), (3, 3), (0, 0))).astype(jnp.bfloat16)
    # width-direction patches at stride 2: (N, H+6, Wo, 7*Cin), bf16
    xrow = jnp.concatenate(
        [xpad[:, :, kj::2, :][:, :, :wo, :] for kj in range(kw)], axis=-1)
    # even/odd input-row phases: stride-2 over rows becomes stride-1 slices.
    xe = xrow[:, 0::2][:, :he]
    xo = xrow[:, 1::2][:, :he]
    xe = jnp.pad(xe, ((0, 0), (0, he - xe.shape[1]), (0, 0), (0, 0)))
    xo = jnp.pad(xo, ((0, 0), (0, he - xo.shape[1]), (0, 0), (0, 0)))
    xeo = jnp.stack([xe, xo], axis=1)          # (N, 2, he, wo, K)

    # weights: OIHW -> (ki, kj, Cin, Cout) -> (7, 7*Cin, C8), bf16
    w_taps = jnp.transpose(weight, (2, 3, 1, 0)).reshape(kh, k, cout)
    w_taps = jnp.pad(w_taps, ((0, 0), (0, 0), (0, c8 - cout))).astype(jnp.bfloat16)
    b_row = jnp.pad(bias, (0, c8 - cout)).reshape(1, c8).astype(jnp.float32)

    # chunk rows so the per-chunk f32 accumulator stays register-resident.
    chunk_rows = max(1, min(ho, (64 * 1024) // (4 * c8 * wo)))

    kernel1 = functools.partial(_conv_elu_stats_kernel, ho=ho, wo=wo,
                                chunk_rows=chunk_rows)
    flops1 = 2 * n * m * (kh * k) * c8
    bytes1 = (xeo.size * 2 + w_taps.size * 2 + b_row.size * 4
              + n * m * c8 * 2 + 2 * n * c8 * 4)
    conv_y, ch_sum, ch_sq = pl.pallas_call(
        kernel1,
        out_shape=(
            jax.ShapeDtypeStruct((n, m, c8), jnp.bfloat16),   # bf16 stream
            jax.ShapeDtypeStruct((n, 1, c8), jnp.float32),
            jax.ShapeDtypeStruct((n, 1, c8), jnp.float32),
        ),
        grid=(n,),
        in_specs=[
            pl.BlockSpec((1, 2, he, wo, k), lambda i: (i, 0, 0, 0, 0)),
            pl.BlockSpec((kh, k, c8), lambda i: (0, 0, 0)),    # resident weights
            pl.BlockSpec((1, c8), lambda i: (0, 0)),
        ],
        out_specs=(
            pl.BlockSpec((1, m, c8), lambda i: (i, 0, 0)),
            pl.BlockSpec((1, 1, c8), lambda i: (i, 0, 0)),     # per-sample partials
            pl.BlockSpec((1, 1, c8), lambda i: (i, 0, 0)),
        ),
        compiler_params=pltpu.CompilerParams(
            dimension_semantics=("parallel",),
            # > v5e/v6e default 32 MiB, < v7x 64 MiB physical VMEM.
            vmem_limit_bytes=48 * 1024 * 1024),
        cost_estimate=pl.CostEstimate(
            flops=flops1, transcendentals=n * m * c8, bytes_accessed=bytes1),
    )(xeo, w_taps, b_row)

    # ---- tiny glue: batch stats -> per-(sample, channel) affine -------------
    count = n * m
    mean = jnp.sum(ch_sum[:, 0, :], axis=0) / count             # (C8,)
    var = jnp.sum(ch_sq[:, 0, :], axis=0) / count - mean * mean
    var = jnp.maximum(var, 0.0)          # guard E[x^2]-E[x]^2 cancellation
    gamma_p = jnp.pad(gamma, (0, c8 - cout))
    beta_p = jnp.pad(beta, (0, c8 - cout))
    scale = gamma_p / jnp.sqrt(var + eps)
    shift = beta_p - mean * scale
    if drop_mask is None:
        keep = jnp.ones((n, cout), jnp.float32)
    else:
        keep = drop_mask.astype(jnp.float32)
    keep_p = jnp.pad(keep, ((0, 0), (0, c8 - cout)))
    scale2 = (keep_p * scale[None, :]).reshape(n, 1, c8)
    shift2 = (keep_p * shift[None, :]).reshape(n, 1, c8)

    # ---- kernel 2: normalize + dropout scaling, m-tiled streaming -----------
    mt = m
    for cand in (4096, 2048, 1024, 512):
        if m % cand == 0:
            mt = cand
            break
    grid2 = (n, m // mt)
    flops2 = 2 * n * m * c8
    bytes2 = n * m * c8 * (2 + 4) + 2 * n * c8 * 4
    out_flat = pl.pallas_call(
        _bn_dropout_kernel,
        out_shape=jax.ShapeDtypeStruct((n, m, c8), jnp.float32),
        grid=grid2,
        in_specs=[
            pl.BlockSpec((1, mt, c8), lambda i, t: (i, t, 0)),
            pl.BlockSpec((1, 1, c8), lambda i, t: (i, 0, 0)),
            pl.BlockSpec((1, 1, c8), lambda i, t: (i, 0, 0)),
        ],
        out_specs=pl.BlockSpec((1, mt, c8), lambda i, t: (i, t, 0)),
        compiler_params=pltpu.CompilerParams(
            dimension_semantics=("parallel", "parallel"),
            vmem_limit_bytes=32 * 1024 * 1024),
        cost_estimate=pl.CostEstimate(flops=flops2, transcendentals=0,
                                      bytes_accessed=bytes2),
    )(conv_y, scale2, shift2)

    # TODO(synk): fuse this channel-slice + layout change into kernel 2 (review
    # opt 2) once Mosaic's narrow-tile 2-D transpose is verified on-target.
    out = out_flat[:, :, :cout].reshape(n, ho, wo, cout)
    return jnp.transpose(out, (0, 3, 1, 2))                      # back to NCHW


# ----------------------------------------------------------------------------
# Pure-JAX reference (mirrors the kernel's bf16 quantization points: bf16
# conv operands and bf16 activation stream; stats/affine in f32).
# ----------------------------------------------------------------------------
def _reference(x, weight, bias, gamma, beta, keep, eps=1e-5):
    xq = x.astype(jnp.bfloat16).astype(jnp.float32)
    wq = weight.astype(jnp.bfloat16).astype(jnp.float32)
    conv = jax.lax.conv_general_dilated(
        xq, wq, window_strides=(2, 2), padding=((3, 3), (3, 3)),
        dimension_numbers=("NCHW", "OIHW", "NCHW"),
        precision=jax.lax.Precision.HIGHEST)
    conv = conv + bias.reshape(1, -1, 1, 1)
    act = jnp.where(conv > 0, conv,
                    jnp.exp(jnp.minimum(conv, 0.0)) - 1.0)       # ELU
    act = act.astype(jnp.bfloat16).astype(jnp.float32)           # bf16 stream
    mean = act.mean(axis=(0, 2, 3), keepdims=True)
    var = act.var(axis=(0, 2, 3), keepdims=True)                 # biased (BN training)
    y = (act - mean) / jnp.sqrt(var + eps)
    y = y * gamma.reshape(1, -1, 1, 1) + beta.reshape(1, -1, 1, 1)
    return y * keep[:, :, None, None]                            # Dropout2d


if __name__ == "__main__":
    key = jax.random.PRNGKey(0)
    k1, k2, k3, k4 = jax.random.split(key, 4)

    N, CIN, H, W = 2, 4, 16, 16
    COUT = 8
    P_DROP = 0.1

    x = jax.random.normal(k1, (N, CIN, H, W), dtype=jnp.float32)
    weight = jax.random.normal(k2, (COUT, CIN, 7, 7), dtype=jnp.float32) * 0.1
    bias = jax.random.normal(k3, (COUT,), dtype=jnp.float32) * 0.1
    gamma = jnp.ones((COUT,), dtype=jnp.float32)     # BatchNorm2d default init
    beta = jnp.zeros((COUT,), dtype=jnp.float32)

    # Dropout2d(0.1) training-mode per-(sample, channel) keep mask, 1/(1-p) scaled.
    keep = (jax.random.bernoulli(k4, 1.0 - P_DROP, (N, COUT))
            .astype(jnp.float32)) / (1.0 - P_DROP)

    out = conv_block_forward(x, weight, bias, gamma, beta, drop_mask=keep)
    out = jax.block_until_ready(out)

    ref = _reference(x, weight, bias, gamma, beta, keep)
    assert out.shape == (N, COUT, H // 2, W // 2), out.shape
    err = jnp.max(jnp.abs(out - ref))
    # bf16 activation storage (review opt 1): where the MXU vs XLA accumulation
    # order flips a bf16 rounding of the pre-BN activation, post-BN values can
    # differ by ~1 bf16 ulp * inv_std; tolerance sized accordingly.
    assert jnp.allclose(out, ref, rtol=1e-2, atol=1e-2), f"max abs err {err}"

    print("KERNEL_OK")
</pallas_src>

<mosaic_0001>
module attributes {stable_mosaic.version = 11 : i64} {
  func.func @_conv_elu_stats_kernel(%arg0: i32, %arg1: memref<1x2x11x8x28xbf16, #tpu.memory_space<vmem>>, %arg2: memref<7x28x8xbf16, #tpu.memory_space<vmem>>, %arg3: memref<1x8xf32, #tpu.memory_space<vmem>>, %arg4: memref<1x64x8xbf16, #tpu.memory_space<vmem>>, %arg5: memref<1x1x8xf32, #tpu.memory_space<vmem>>, %arg6: memref<1x1x8xf32, #tpu.memory_space<vmem>>) attributes {dimension_semantics = [#tpu.dimension_semantics<parallel>], iteration_bounds = array<i64: 2>, scalar_prefetch = 0 : i64, scratch_operands = 0 : i64, tpu.core_type = #tpu.core_type<tc>, window_params = [{transform_indices = @transform_0, window_bounds = array<i64: 1, 2, 11, 8, 28>}, {pipeline_mode = #tpu.pipeline_mode<synchronous>, transform_indices = @transform_1, window_bounds = array<i64: 7, 28, 8>}, {pipeline_mode = #tpu.pipeline_mode<synchronous>, transform_indices = @transform_2, window_bounds = array<i64: 1, 8>}, {transform_indices = @transform_3, window_bounds = array<i64: 1, 64, 8>}, {transform_indices = @transform_4, window_bounds = array<i64: 1, 1, 8>}, {transform_indices = @transform_5, window_bounds = array<i64: 1, 1, 8>}]} {
    %cst = arith.constant 0.000000e+00 : f32
    %0 = vector.broadcast %cst : f32 to vector<1x8xf32>
    %cst_0 = arith.constant 0.000000e+00 : f32
    %1 = vector.broadcast %cst_0 : f32 to vector<1x8xf32>
    %c0 = arith.constant 0 : index
    %c0_1 = arith.constant 0 : index
    %2 = vector.load %arg3[%c0, %c0_1] : memref<1x8xf32, #tpu.memory_space<vmem>>, vector<1x8xf32>
    %3 = vector.shape_cast %2 : vector<1x8xf32> to vector<1x8xf32>
    %4 = vector.broadcast %3 : vector<1x8xf32> to vector<64x8xf32>
    %c0_2 = arith.constant 0 : index
    %c0_3 = arith.constant 0 : index
    %c0_4 = arith.constant 0 : index
    %c0_5 = arith.constant 0 : index
    %c0_6 = arith.constant 0 : index
    %5 = vector.load %arg1[%c0_2, %c0_3, %c0_4, %c0_5, %c0_6] : memref<1x2x11x8x28xbf16, #tpu.memory_space<vmem>>, vector<1x1x8x8x28xbf16>
    %6 = vector.shape_cast %5 : vector<1x1x8x8x28xbf16> to vector<8x8x28xbf16>
    %7 = vector.shape_cast %6 : vector<8x8x28xbf16> to vector<64x28xbf16>
    %c0_7 = arith.constant 0 : index
    %c0_8 = arith.constant 0 : index
    %c0_9 = arith.constant 0 : index
    %8 = vector.load %arg2[%c0_7, %c0_8, %c0_9] : memref<7x28x8xbf16, #tpu.memory_space<vmem>>, vector<1x28x8xbf16>
    %9 = vector.shape_cast %8 : vector<1x28x8xbf16> to vector<28x8xbf16>
    %cst_10 = arith.constant dense<0.000000e+00> : vector<64x8xf32>
    %10 = tpu.matmul %7, %9, %cst_10 {dimension_numbers = #tpu.dot_dimension_numbers<[1], [0], [0], [1], [0, 0, 1, 1], [], []>} : vector<64x28xbf16>, vector<28x8xbf16>, vector<64x8xf32> -> vector<64x8xf32>
    %11 = arith.addf %4, %10 : vector<64x8xf32>
    %c0_11 = arith.constant 0 : index
    %c0_12 = arith.constant 0 : index
    %c1 = arith.constant 1 : index
    %c0_13 = arith.constant 0 : index
    %c0_14 = arith.constant 0 : index
    %12 = vector.load %arg1[%c0_11, %c0_12, %c1, %c0_13, %c0_14] : memref<1x2x11x8x28xbf16, #tpu.memory_space<vmem>>, vector<1x1x8x8x28xbf16>
    %13 = vector.shape_cast %12 : vector<1x1x8x8x28xbf16> to vector<8x8x28xbf16>
    %14 = vector.shape_cast %13 : vector<8x8x28xbf16> to vector<64x28xbf16>
    %c2 = arith.constant 2 : index
    %c0_15 = arith.constant 0 : index
    %c0_16 = arith.constant 0 : index
    %15 = vector.load %arg2[%c2, %c0_15, %c0_16] : memref<7x28x8xbf16, #tpu.memory_space<vmem>>, vector<1x28x8xbf16>
    %16 = vector.shape_cast %15 : vector<1x28x8xbf16> to vector<28x8xbf16>
    %cst_17 = arith.constant dense<0.000000e+00> : vector<64x8xf32>
    %17 = tpu.matmul %14, %16, %cst_17 {dimension_numbers = #tpu.dot_dimension_numbers<[1], [0], [0], [1], [0, 0, 1, 1], [], []>} : vector<64x28xbf16>, vector<28x8xbf16>, vector<64x8xf32> -> vector<64x8xf32>
    %18 = arith.addf %11, %17 : vector<64x8xf32>
    %c0_18 = arith.constant 0 : index
    %c0_19 = arith.constant 0 : index
    %c2_20 = arith.constant 2 : index
    %c0_21 = arith.constant 0 : index
    %c0_22 = arith.constant 0 : index
    %19 = vector.load %arg1[%c0_18, %c0_19, %c2_20, %c0_21, %c0_22] : memref<1x2x11x8x28xbf16, #tpu.memory_space<vmem>>, vector<1x1x8x8x28xbf16>
    %20 = vector.shape_cast %19 : vector<1x1x8x8x28xbf16> to vector<8x8x28xbf16>
    %21 = vector.shape_cast %20 : vector<8x8x28xbf16> to vector<64x28xbf16>
    %c4 = arith.constant 4 : index
    %c0_23 = arith.constant 0 : index
    %c0_24 = arith.constant 0 : index
    %22 = vector.load %arg2[%c4, %c0_23, %c0_24] : memref<7x28x8xbf16, #tpu.memory_space<vmem>>, vector<1x28x8xbf16>
    %23 = vector.shape_cast %22 : vector<1x28x8xbf16> to vector<28x8xbf16>
    %cst_25 = arith.constant dense<0.000000e+00> : vector<64x8xf32>
    %24 = tpu.matmul %21, %23, %cst_25 {dimension_numbers = #tpu.dot_dimension_numbers<[1], [0], [0], [1], [0, 0, 1, 1], [], []>} : vector<64x28xbf16>, vector<28x8xbf16>, vector<64x8xf32> -> vector<64x8xf32>
    %25 = arith.addf %18, %24 : vector<64x8xf32>
    %c0_26 = arith.constant 0 : index
    %c0_27 = arith.constant 0 : index
    %c3 = arith.constant 3 : index
    %c0_28 = arith.constant 0 : index
    %c0_29 = arith.constant 0 : index
    %26 = vector.load %arg1[%c0_26, %c0_27, %c3, %c0_28, %c0_29] : memref<1x2x11x8x28xbf16, #tpu.memory_space<vmem>>, vector<1x1x8x8x28xbf16>
    %27 = vector.shape_cast %26 : vector<1x1x8x8x28xbf16> to vector<8x8x28xbf16>
    %28 = vector.shape_cast %27 : vector<8x8x28xbf16> to vector<64x28xbf16>
    %c6 = arith.constant 6 : index
    %c0_30 = arith.constant 0 : index
    %c0_31 = arith.constant 0 : index
    %29 = vector.load %arg2[%c6, %c0_30, %c0_31] : memref<7x28x8xbf16, #tpu.memory_space<vmem>>, vector<1x28x8xbf16>
    %30 = vector.shape_cast %29 : vector<1x28x8xbf16> to vector<28x8xbf16>
    %cst_32 = arith.constant dense<0.000000e+00> : vector<64x8xf32>
    %31 = tpu.matmul %28, %30, %cst_32 {dimension_numbers = #tpu.dot_dimension_numbers<[1], [0], [0], [1], [0, 0, 1, 1], [], []>} : vector<64x28xbf16>, vector<28x8xbf16>, vector<64x8xf32> -> vector<64x8xf32>
    %32 = arith.addf %25, %31 : vector<64x8xf32>
    %c0_33 = arith.constant 0 : index
    %c1_34 = arith.constant 1 : index
    %c0_35 = arith.constant 0 : index
    %c0_36 = arith.constant 0 : index
    %c0_37 = arith.constant 0 : index
    %33 = vector.load %arg1[%c0_33, %c1_34, %c0_35, %c0_36, %c0_37] : memref<1x2x11x8x28xbf16, #tpu.memory_space<vmem>>, vector<1x1x8x8x28xbf16>
    %34 = vector.shape_cast %33 : vector<1x1x8x8x28xbf16> to vector<8x8x28xbf16>
    %35 = vector.shape_cast %34 : vector<8x8x28xbf16> to vector<64x28xbf16>
    %c1_38 = arith.constant 1 : index
    %c0_39 = arith.constant 0 : index
    %c0_40 = arith.constant 0 : index
    %36 = vector.load %arg2[%c1_38, %c0_39, %c0_40] : memref<7x28x8xbf16, #tpu.memory_space<vmem>>, vector<1x28x8xbf16>
    %37 = vector.shape_cast %36 : vector<1x28x8xbf16> to vector<28x8xbf16>
    %cst_41 = arith.constant dense<0.000000e+00> : vector<64x8xf32>
    %38 = tpu.matmul %35, %37, %cst_41 {dimension_numbers = #tpu.dot_dimension_numbers<[1], [0], [0], [1], [0, 0, 1, 1], [], []>} : vector<64x28xbf16>, vector<28x8xbf16>, vector<64x8xf32> -> vector<64x8xf32>
    %39 = arith.addf %32, %38 : vector<64x8xf32>
    %c0_42 = arith.constant 0 : index
    %c1_43 = arith.constant 1 : index
    %c1_44 = arith.constant 1 : index
    %c0_45 = arith.constant 0 : index
    %c0_46 = arith.constant 0 : index
    %40 = vector.load %arg1[%c0_42, %c1_43, %c1_44, %c0_45, %c0_46] : memref<1x2x11x8x28xbf16, #tpu.memory_space<vmem>>, vector<1x1x8x8x28xbf16>
    %41 = vector.shape_cast %40 : vector<1x1x8x8x28xbf16> to vector<8x8x28xbf16>
    %42 = vector.shape_cast %41 : vector<8x8x28xbf16> to vector<64x28xbf16>
    %c3_47 = arith.constant 3 : index
    %c0_48 = arith.constant 0 : index
    %c0_49 = arith.constant 0 : index
    %43 = vector.load %arg2[%c3_47, %c0_48, %c0_49] : memref<7x28x8xbf16, #tpu.memory_space<vmem>>, vector<1x28x8xbf16>
    %44 = vector.shape_cast %43 : vector<1x28x8xbf16> to vector<28x8xbf16>
    %cst_50 = arith.constant dense<0.000000e+00> : vector<64x8xf32>
    %45 = tpu.matmul %42, %44, %cst_50 {dimension_numbers = #tpu.dot_dimension_numbers<[1], [0], [0], [1], [0, 0, 1, 1], [], []>} : vector<64x28xbf16>, vector<28x8xbf16>, vector<64x8xf32> -> vector<64x8xf32>
    %46 = arith.addf %39, %45 : vector<64x8xf32>
    %c0_51 = arith.constant 0 : index
    %c1_52 = arith.constant 1 : index
    %c2_53 = arith.constant 2 : index
    %c0_54 = arith.constant 0 : index
    %c0_55 = arith.constant 0 : index
    %47 = vector.load %arg1[%c0_51, %c1_52, %c2_53, %c0_54, %c0_55] : memref<1x2x11x8x28xbf16, #tpu.memory_space<vmem>>, vector<1x1x8x8x28xbf16>
    %48 = vector.shape_cast %47 : vector<1x1x8x8x28xbf16> to vector<8x8x28xbf16>
    %49 = vector.shape_cast %48 : vector<8x8x28xbf16> to vector<64x28xbf16>
    %c5 = arith.constant 5 : index
    %c0_56 = arith.constant 0 : index
    %c0_57 = arith.constant 0 : index
    %50 = vector.load %arg2[%c5, %c0_56, %c0_57] : memref<7x28x8xbf16, #tpu.memory_space<vmem>>, vector<1x28x8xbf16>
    %51 = vector.shape_cast %50 : vector<1x28x8xbf16> to vector<28x8xbf16>
    %cst_58 = arith.constant dense<0.000000e+00> : vector<64x8xf32>
    %52 = tpu.matmul %49, %51, %cst_58 {dimension_numbers = #tpu.dot_dimension_numbers<[1], [0], [0], [1], [0, 0, 1, 1], [], []>} : vector<64x28xbf16>, vector<28x8xbf16>, vector<64x8xf32> -> vector<64x8xf32>
    %53 = arith.addf %46, %52 : vector<64x8xf32>
    %cst_59 = arith.constant 0.000000e+00 : f32
    %54 = vector.broadcast %cst_59 : f32 to vector<64x8xf32>
    %55 = arith.cmpf ogt, %53, %54 : vector<64x8xf32>
    %cst_60 = arith.constant 0.000000e+00 : f32
    %56 = vector.broadcast %cst_60 : f32 to vector<64x8xf32>
    %57 = arith.minimumf %53, %56 : vector<64x8xf32>
    %58 = math.exp %57 : vector<64x8xf32>
    %cst_61 = arith.constant 1.000000e+00 : f32
    %59 = vector.broadcast %cst_61 : f32 to vector<64x8xf32>
    %60 = arith.subf %58, %59 : vector<64x8xf32>
    %61 = arith.select %55, %53, %60 : vector<64x8xi1>, vector<64x8xf32>
    %62 = arith.truncf %61 : vector<64x8xf32> to vector<64x8xbf16>
    %63 = arith.extf %62 : vector<64x8xbf16> to vector<64x8xf32>
    %cst_62 = arith.constant dense<0.000000e+00> : vector<8xf32>
    %64 = vector.multi_reduction <add>, %63, %cst_62 [0] : vector<64x8xf32> to vector<8xf32>
    %65 = vector.shape_cast %64 : vector<8xf32> to vector<1x8xf32>
    %66 = arith.addf %0, %65 : vector<1x8xf32>
    %67 = arith.mulf %63, %63 : vector<64x8xf32>
    %cst_63 = arith.constant dense<0.000000e+00> : vector<8xf32>
    %68 = vector.multi_reduction <add>, %67, %cst_63 [0] : vector<64x8xf32> to vector<8xf32>
    %69 = vector.shape_cast %68 : vector<8xf32> to vector<1x8xf32>
    %70 = arith.addf %1, %69 : vector<1x8xf32>
    %c0_64 = arith.constant 0 : index
    %c0_65 = arith.constant 0 : index
    %c0_66 = arith.constant 0 : index
    %71 = vector.load %arg4[%c0_64, %c0_65, %c0_66] : memref<1x64x8xbf16, #tpu.memory_space<vmem>>, vector<1x64x8xbf16>
    %72 = vector.shape_cast %71 : vector<1x64x8xbf16> to vector<64x8xbf16>
    %73 = vector.shape_cast %62 : vector<64x8xbf16> to vector<1x64x8xbf16>
    tpu.vector_store %arg4[%c0_64, %c0_65, %c0_66], %73 {strides = array<i32>} : memref<1x64x8xbf16, #tpu.memory_space<vmem>>, vector<1x64x8xbf16>,
    %74 = vector.shape_cast %66 : vector<1x8xf32> to vector<1x1x8xf32>
    %c0_67 = arith.constant 0 : index
    %c0_68 = arith.constant 0 : index
    %c0_69 = arith.constant 0 : index
    %75 = vector.load %arg5[%c0_67, %c0_68, %c0_69] : memref<1x1x8xf32, #tpu.memory_space<vmem>>, vector<1x1x8xf32>
    tpu.vector_store %arg5[%c0_67, %c0_68, %c0_69], %74 {strides = array<i32>} : memref<1x1x8xf32, #tpu.memory_space<vmem>>, vector<1x1x8xf32>,
    %76 = vector.shape_cast %70 : vector<1x8xf32> to vector<1x1x8xf32>
    %c0_70 = arith.constant 0 : index
    %c0_71 = arith.constant 0 : index
    %c0_72 = arith.constant 0 : index
    %77 = vector.load %arg6[%c0_70, %c0_71, %c0_72] : memref<1x1x8xf32, #tpu.memory_space<vmem>>, vector<1x1x8xf32>
    tpu.vector_store %arg6[%c0_70, %c0_71, %c0_72], %76 {strides = array<i32>} : memref<1x1x8xf32, #tpu.memory_space<vmem>>, vector<1x1x8xf32>,
    return
  }
  func.func @transform_0(%arg0: i32) -> (i32, i32, i32, i32, i32) {
    %c0_i32 = arith.constant 0 : i32
    %c0_i32_0 = arith.constant 0 : i32
    %c0_i32_1 = arith.constant 0 : i32
    %c0_i32_2 = arith.constant 0 : i32
    %c0_i32_3 = arith.constant 0 : i32
    return %arg0, %c0_i32, %c0_i32_0, %c0_i32_1, %c0_i32_2 : i32, i32, i32, i32, i32
  }
  func.func @transform_1(%arg0: i32) -> (i32, i32, i32) {
    %c0_i32 = arith.constant 0 : i32
    %c0_i32_0 = arith.constant 0 : i32
    %c0_i32_1 = arith.constant 0 : i32
    %c0_i32_2 = arith.constant 0 : i32
    return %c0_i32, %c0_i32_0, %c0_i32_1 : i32, i32, i32
  }
  func.func @transform_2(%arg0: i32) -> (i32, i32) {
    %c0_i32 = arith.constant 0 : i32
    %c0_i32_0 = arith.constant 0 : i32
    %c0_i32_1 = arith.constant 0 : i32
    return %c0_i32, %c0_i32_0 : i32, i32
  }
  func.func @transform_3(%arg0: i32) -> (i32, i32, i32) {
    %c0_i32 = arith.constant 0 : i32
    %c0_i32_0 = arith.constant 0 : i32
    %c0_i32_1 = arith.constant 0 : i32
    return %arg0, %c0_i32, %c0_i32_0 : i32, i32, i32
  }
  func.func @transform_4(%arg0: i32) -> (i32, i32, i32) {
    %c0_i32 = arith.constant 0 : i32
    %c0_i32_0 = arith.constant 0 : i32
    %c0_i32_1 = arith.constant 0 : i32
    return %arg0, %c0_i32, %c0_i32_0 : i32, i32, i32
  }
  func.func @transform_5(%arg0: i32) -> (i32, i32, i32) {
    %c0_i32 = arith.constant 0 : i32
    %c0_i32_0 = arith.constant 0 : i32
    %c0_i32_1 = arith.constant 0 : i32
    return %arg0, %c0_i32, %c0_i32_0 : i32, i32, i32
  }
}

module attributes {stable_mosaic.version = 11 : i64} {
  func.func @_bn_dropout_kernel(%arg0: i32, %arg1: i32, %arg2: memref<1x64x8xbf16, #tpu.memory_space<vmem>>, %arg3: memref<1x1x8xf32, #tpu.memory_space<vmem>>, %arg4: memref<1x1x8xf32, #tpu.memory_space<vmem>>, %arg5: memref<1x64x8xf32, #tpu.memory_space<vmem>>) attributes {dimension_semantics = [#tpu.dimension_semantics<parallel>, #tpu.dimension_semantics<parallel>], iteration_bounds = array<i64: 2, 1>, scalar_prefetch = 0 : i64, scratch_operands = 0 : i64, tpu.core_type = #tpu.core_type<tc>, window_params = [{transform_indices = @transform_0, window_bounds = array<i64: 1, 64, 8>}, {transform_indices = @transform_1, window_bounds = array<i64: 1, 1, 8>}, {transform_indices = @transform_2, window_bounds = array<i64: 1, 1, 8>}, {transform_indices = @transform_3, window_bounds = array<i64: 1, 64, 8>}]} {
    %c0 = arith.constant 0 : index
    %c0_0 = arith.constant 0 : index
    %c0_1 = arith.constant 0 : index
    %0 = vector.load %arg2[%c0, %c0_0, %c0_1] : memref<1x64x8xbf16, #tpu.memory_space<vmem>>, vector<1x64x8xbf16>
    %1 = arith.extf %0 : vector<1x64x8xbf16> to vector<1x64x8xf32>
    %c0_2 = arith.constant 0 : index
    %c0_3 = arith.constant 0 : index
    %c0_4 = arith.constant 0 : index
    %2 = vector.load %arg3[%c0_2, %c0_3, %c0_4] : memref<1x1x8xf32, #tpu.memory_space<vmem>>, vector<1x1x8xf32>
    %3 = vector.broadcast %2 : vector<1x1x8xf32> to vector<1x64x8xf32>
    %4 = arith.mulf %1, %3 : vector<1x64x8xf32>
    %c0_5 = arith.constant 0 : index
    %c0_6 = arith.constant 0 : index
    %c0_7 = arith.constant 0 : index
    %5 = vector.load %arg4[%c0_5, %c0_6, %c0_7] : memref<1x1x8xf32, #tpu.memory_space<vmem>>, vector<1x1x8xf32>
    %6 = vector.broadcast %5 : vector<1x1x8xf32> to vector<1x64x8xf32>
    %7 = arith.addf %4, %6 : vector<1x64x8xf32>
    %c0_8 = arith.constant 0 : index
    %c0_9 = arith.constant 0 : index
    %c0_10 = arith.constant 0 : index
    %8 = vector.load %arg5[%c0_8, %c0_9, %c0_10] : memref<1x64x8xf32, #tpu.memory_space<vmem>>, vector<1x64x8xf32>
    tpu.vector_store %arg5[%c0_8, %c0_9, %c0_10], %7 {strides = array<i32>} : memref<1x64x8xf32, #tpu.memory_space<vmem>>, vector<1x64x8xf32>,
    return
  }
  func.func @transform_0(%arg0: i32, %arg1: i32) -> (i32, i32, i32) {
    %c0_i32 = arith.constant 0 : i32
    %c0_i32_0 = arith.constant 0 : i32
    return %arg0, %arg1, %c0_i32 : i32, i32, i32
  }
  func.func @transform_1(%arg0: i32, %arg1: i32) -> (i32, i32, i32) {
    %c0_i32 = arith.constant 0 : i32
    %c0_i32_0 = arith.constant 0 : i32
    %c0_i32_1 = arith.constant 0 : i32
    return %arg0, %c0_i32, %c0_i32_0 : i32, i32, i32
  }
  func.func @transform_2(%arg0: i32, %arg1: i32) -> (i32, i32, i32) {
    %c0_i32 = arith.constant 0 : i32
    %c0_i32_0 = arith.constant 0 : i32
    %c0_i32_1 = arith.constant 0 : i32
    return %arg0, %c0_i32, %c0_i32_0 : i32, i32, i32
  }
  func.func @transform_3(%arg0: i32, %arg1: i32) -> (i32, i32, i32) {
    %c0_i32 = arith.constant 0 : i32
    %c0_i32_0 = arith.constant 0 : i32
    return %arg0, %arg1, %c0_i32 : i32, i32, i32
  }
}

</mosaic_0001>

<llo_original>
// kernel: conv_block_forward.3
$region0: #{conv_block_forward.3}
  #allocation0 [shape = 'u32[]', space=smem, size = 0x4, offset = 0x4, fixed_abs, tag = 'smem constant byte address 0x4 - core index']
  #allocation1 [shape = 'u32[144,128]{1,0:T(1,128)}', space=vmem, size = 0x12000, scoped, tag = 'internal scratch']
  %s0 = inlined_call_operand.vmem [shape: bf16[2,64,8], index: 0, kind: input, shape index: {}]
  %s1 = inlined_call_operand.vmem [shape: f32[2,1,8], index: 1, kind: input, shape index: {}]
  %s2 = inlined_call_operand.vmem [shape: f32[2,1,8], index: 2, kind: input, shape index: {}]
  %s3 = inlined_call_operand.vmem [shape: f32[2,64,8], index: 3, kind: output, shape index: {}]
  %s4 = sld [smem:[#allocation0]]
  $region45: #{conv_block_forward.3} parent=0
    _
  %s6 = ssub.s32 1, %s4
  %s7 = scalar_select 0, %s6, %s4
  loop: start=0, step=1, limit=4
  $region2: #{conv_block_forward.3} parent=0 // loop_pre_header
    _
  $region3: #{conv_block_forward.3} parent=0 // loop_header
    %s9 = sphi 0, %s13
    %p10 = scmp.ge.s32.totalorder %s9, 4
    %s16 = sphi 0, %s28
    %s17 = sphi 0, %s24
    %s18 = sphi 0, %s16
    %s19 = sphi 0, %s17
    %s20 = sphi 0, %s18
    %s21 = sphi 0, %s19
    %s33 = sphi 0, %s35
    %s36 = sphi 0, %s33
    %s37 = sphi 0, %s36
    %s53 = sphi 0, %s37
    %s59 = sphi 0, %s61
    %s62 = sphi 0, %s59
    %s63 = sphi 0, %s62
    %s79 = sphi 0, %s63
    %s85 = sphi 0, %s87
    %s88 = sphi 0, %s85
    %s89 = sphi 0, %s88
    %s105 = sphi 0, %s89
    %s113 = sphi 0, %s115
    %s116 = sphi 0, %s113
    %s117 = sphi 0, %s116
    %s133 = sphi 0, %s117
  $region4: #{conv_block_forward.3} parent=0 // loop_header_branch
    %12 = sbr.rel (%p10) target = $region8
  $region5: #{conv_block_forward.3} parent=0 // loop_body
    %s14 = ssub.s32 %s9, 1
    %s15 = ssub.s32 %s9, 2
    %s22 = sadd.s32 1, %s17
    %p23 = scmp.ge.s32.totalorder %s22, 1
    %s24 = scalar_select %p23, 0, %s22
    %s25 = sadd.s32 1, %s16
    %s26 = scalar_select %p23, %s25, %s16
    %p27 = scmp.ge.s32.totalorder %s26, 2
    %s28 = scalar_select %p27, 0, %s26
    %s29 = ssub.s32 %s16, %s28
    %s30 = ssub.s32 %s17, %s24
    %s31 = sor.u32 %s29, %s30
    %p32 = scmp.eq.s32.totalorder %s31, 0
    %s34 = sadd.s32 %s33, 1
    %s35 = scalar_select %p32, %s33, %s34
    %p38 = pneg %p32
    %p39 = scmp.eq.s32.totalorder %s9, 1
    %p40 = por %p38, %p39
    %p41 = scmp.ne.s32.totalorder %s33, %s36
    %p42 = scmp.eq.s32.totalorder %s9, 0
    %p43 = por %p41, %p42
    %p44 = scmp.ne.s32.totalorder %s33, %s36
    %p45 = scmp.eq.s32.totalorder %s14, 1
    %p46 = por %p44, %p45
    %p47 = scmp.ne.s32.totalorder %s36, %s37
    %p48 = scmp.eq.s32.totalorder %s14, 0
    %p49 = por %p47, %p48
    %p50 = scmp.ne.s32.totalorder %s36, %s37
    %p51 = scmp.eq.s32.totalorder %s15, 1
    %p52 = por %p50, %p51
    %p54 = scmp.ne.s32.totalorder %s37, %s53
    %p55 = scmp.eq.s32.totalorder %s15, 0
    %p56 = por %p54, %p55
    %s57 = ssub.s32 %s16, %s28
    %p58 = scmp.eq.s32.totalorder %s57, 0
    %s60 = sadd.s32 %s59, 1
    %s61 = scalar_select %p58, %s59, %s60
    %p64 = pneg %p58
    %p65 = scmp.eq.s32.totalorder %s9, 1
    %p66 = por %p64, %p65
    %p67 = scmp.ne.s32.totalorder %s59, %s62
    %p68 = scmp.eq.s32.totalorder %s9, 0
    %p69 = por %p67, %p68
    %p70 = scmp.ne.s32.totalorder %s59, %s62
    %p71 = scmp.eq.s32.totalorder %s14, 1
    %p72 = por %p70, %p71
    %p73 = scmp.ne.s32.totalorder %s62, %s63
    %p74 = scmp.eq.s32.totalorder %s14, 0
    %p75 = por %p73, %p74
    %p76 = scmp.ne.s32.totalorder %s62, %s63
    %p77 = scmp.eq.s32.totalorder %s15, 1
    %p78 = por %p76, %p77
    %p80 = scmp.ne.s32.totalorder %s63, %s79
    %p81 = scmp.eq.s32.totalorder %s15, 0
    %p82 = por %p80, %p81
    %s83 = ssub.s32 %s16, %s28
    %p84 = scmp.eq.s32.totalorder %s83, 0
    %s86 = sadd.s32 %s85, 1
    %s87 = scalar_select %p84, %s85, %s86
    %p90 = pneg %p84
    %p91 = scmp.eq.s32.totalorder %s9, 1
    %p92 = por %p90, %p91
    %p93 = scmp.ne.s32.totalorder %s85, %s88
    %p94 = scmp.eq.s32.totalorder %s9, 0
    %p95 = por %p93, %p94
    %p96 = scmp.ne.s32.totalorder %s85, %s88
    %p97 = scmp.eq.s32.totalorder %s14, 1
    %p98 = por %p96, %p97
    %p99 = scmp.ne.s32.totalorder %s88, %s89
    %p100 = scmp.eq.s32.totalorder %s14, 0
    %p101 = por %p99, %p100
    %p102 = scmp.ne.s32.totalorder %s88, %s89
    %p103 = scmp.eq.s32.totalorder %s15, 1
    %p104 = por %p102, %p103
    %p106 = scmp.ne.s32.totalorder %s89, %s105
    %p107 = scmp.eq.s32.totalorder %s15, 0
    %p108 = por %p106, %p107
    %s109 = ssub.s32 %s16, %s28
    %s110 = ssub.s32 %s17, %s24
    %s111 = sor.u32 %s109, %s110
    %p112 = scmp.eq.s32.totalorder %s111, 0
    %s114 = sadd.s32 %s113, 1
    %s115 = scalar_select %p112, %s113, %s114
    %p118 = pneg %p112
    %p119 = scmp.eq.s32.totalorder %s9, 1
    %p120 = por %p118, %p119
    %p121 = scmp.ne.s32.totalorder %s113, %s116
    %p122 = scmp.eq.s32.totalorder %s9, 0
    %p123 = por %p121, %p122
    %p124 = scmp.ne.s32.totalorder %s113, %s116
    %p125 = scmp.eq.s32.totalorder %s14, 1
    %p126 = por %p124, %p125
    %p127 = scmp.ne.s32.totalorder %s116, %s117
    %p128 = scmp.eq.s32.totalorder %s14, 0
    %p129 = por %p127, %p128
    %p130 = scmp.ne.s32.totalorder %s116, %s117
    %p131 = scmp.eq.s32.totalorder %s15, 1
    %p132 = por %p130, %p131
    %p134 = scmp.ne.s32.totalorder %s117, %s133
    %p135 = scmp.eq.s32.totalorder %s15, 0
    %p136 = por %p134, %p135
    %p137 = scmp.le.s32.totalorder 1, %s9
    %p138 = scmp.lt.s32.totalorder %s9, 3
    %p139 = pnand %p137, %p138
    %p140 = pneg %p139
    // Predicated region
    $region9: #{conv_block_forward.3} parent=5 // pred_check
      _
    $region10: #{conv_block_forward.3} parent=5 // pred_check_branch
      %142 = sbr.rel (%p139) target = $region12
    $region11: #{conv_block_forward.3} parent=5 // pred_region
      %s143 = ssub.s32 %s9, 1
    $region12: #{conv_block_forward.3} parent=5 // pred_fallthru
      _
    %p144 = scmp.lt.s32.totalorder %s9, 2
    // Predicated region
    $region13: #{conv_block_forward.3} parent=5 // pred_check
      %p145 = pneg %p144
    $region14: #{conv_block_forward.3} parent=5 // pred_check_branch
      %147 = sbr.rel (%p145) target = $region16
    $region15: #{conv_block_forward.3} parent=5 // pred_region
      // Predicated region
      $region17: #{conv_block_forward.3} parent=15 // pred_check
        %p148 = pneg %p43
      $region18: #{conv_block_forward.3} parent=15 // pred_check_branch
        %150 = sbr.rel (%p148) target = $region20
      $region19: #{conv_block_forward.3} parent=15 // pred_region
        %s151 = smul.u32 8, %s17
        %p152 = scmp.lt.s32.totalorder %s16, 1
        %s153 = scalar_select %p152, %s16, 1
        %p154 = scmp.lt.s32.totalorder %s151, 7
        %s155 = scalar_select %p154, %s151, 7
        %s156 = smul.addr %s153, 8
        %s157 = sadd.s32 %s155, %s156
        %s158 = smul.addr %s157, 4
        %s159 = scalar_lea.vmem %s0, %s158
        %s160 = smul.u32 8, %s17
      $region20: #{conv_block_forward.3} parent=15 // pred_fallthru
        _
      // Predicated region
      $region21: #{conv_block_forward.3} parent=15 // pred_check
        %p161 = pneg %p69
      $region22: #{conv_block_forward.3} parent=15 // pred_check_branch
        %163 = sbr.rel (%p161) target = $region24
      $region23: #{conv_block_forward.3} parent=15 // pred_region
        %p164 = scmp.lt.s32.totalorder %s16, 1
        %s165 = scalar_select %p164, %s16, 1
        %s166 = scalar_lea.vmem %s1, %s165
      $region24: #{conv_block_forward.3} parent=15 // pred_fallthru
        _
      // Predicated region
      $region25: #{conv_block_forward.3} parent=15 // pred_check
        %p167 = pneg %p95
      $region26: #{conv_block_forward.3} parent=15 // pred_check_branch
        %169 = sbr.rel (%p167) target = $region28
      $region27: #{conv_block_forward.3} parent=15 // pred_region
        %p170 = scmp.lt.s32.totalorder %s16, 1
        %s171 = scalar_select %p170, %s16, 1
        %s172 = scalar_lea.vmem %s2, %s171
      $region28: #{conv_block_forward.3} parent=15 // pred_fallthru
        _
    $region16: #{conv_block_forward.3} parent=5 // pred_fallthru
      _
    %p173 = scmp.le.s32.totalorder 1, %s9
    %p174 = scmp.lt.s32.totalorder %s9, 3
    %p175 = pnand %p173, %p174
    %p176 = pneg %p175
    // Predicated region
    $region29: #{conv_block_forward.3} parent=5 // pred_check
      _
    $region30: #{conv_block_forward.3} parent=5 // pred_check_branch
      %178 = sbr.rel (%p175) target = $region32
    $region31: #{conv_block_forward.3} parent=5 // pred_region
      %s179 = ssub.s32 %s9, 1
      %s180 = smul.u32 8, %s19
      %p181 = scmp.lt.s32.totalorder %s18, 1
      %s182 = scalar_select %p181, %s18, 1
      %p183 = scmp.lt.s32.totalorder %s180, 7
      %s184 = scalar_select %p183, %s180, 7
      %s185 = smul.addr %s182, 8
      %s186 = sadd.s32 %s184, %s185
      %s187 = smul.addr %s186, 4
      %s188 = scalar_lea.vmem %s0, %s187
      %p189 = pneg %p49
      %p190 = pneg %p46
      %p191 = scmp.lt.s32.totalorder %s18, 1
      %s192 = scalar_select %p191, %s18, 1
      %s193 = scalar_lea.vmem %s1, %s192
      %p194 = pneg %p75
      %p195 = pneg %p72
      %p196 = scmp.lt.s32.totalorder %s18, 1
      %s197 = scalar_select %p196, %s18, 1
      %s198 = scalar_lea.vmem %s2, %s197
      %p199 = pneg %p101
      %p200 = pneg %p98
      %p201 = pneg %p129
      %p202 = pneg %p126
      %s203 = smul.u32 8, %s19
      %p204 = scmp.lt.s32.totalorder %s18, 1
      %s205 = scalar_select %p204, %s18, 1
      %p206 = scmp.lt.s32.totalorder %s203, 7
      %s207 = scalar_select %p206, %s203, 7
      %s208 = smul.addr %s205, 8
      %s209 = sadd.s32 %s207, %s208
      %s210 = smul.addr %s209, 8
      %s211 = scalar_lea.vmem %s3, %s210
      %s212 = smul.u32 8, %s19
      %p213 = scmp.lt.s32.totalorder %s18, 1
      %s214 = scalar_select %p213, %s18, 1
      %p215 = scmp.lt.s32.totalorder %s212, 7
      %s216 = scalar_select %p215, %s212, 7
      %s217 = smul.addr %s214, 8
      %s218 = sadd.s32 %s216, %s217
      %s219 = smul.addr %s218, 4
      %s220 = scalar_lea.vmem %s0, %s219
      %s221 = smul.u32 8, %s19
      %p222 = scmp.lt.s32.totalorder %s18, 1
      %s223 = scalar_select %p222, %s18, 1
      %s224 = scalar_lea.vmem %s1, %s223
      %p225 = scmp.lt.s32.totalorder %s18, 1
      %s226 = scalar_select %p225, %s18, 1
      %s227 = scalar_lea.vmem %s2, %s226
      %s228 = smul.u32 8, %s19
      %p229 = scmp.lt.s32.totalorder %s18, 1
      %s230 = scalar_select %p229, %s18, 1
      %p231 = scmp.lt.s32.totalorder %s228, 7
      %s232 = scalar_select %p231, %s228, 7
      %s233 = smul.addr %s230, 8
      %s234 = sadd.s32 %s232, %s233
      %s235 = smul.addr %s234, 8
      %s236 = scalar_lea.vmem %s3, %s235
      %s237 = smul.u32 8, %s19
      %v238 = vld [vmem:[%s220] sm:$0xf]
      %v239 = vld [vmem:[%s220 + $0x4] sm:$0xf]
      %v240 = vld [vmem:[%s220 + $0x8] sm:$0xf]
      %v241 = vld [vmem:[%s220 + $0xc] sm:$0xf]
      %v242 = vld [vmem:[%s220 + $0x10] sm:$0xf]
      %v243 = vld [vmem:[%s220 + $0x14] sm:$0xf]
      %v244 = vld [vmem:[%s220 + $0x18] sm:$0xf]
      %v245 = vld [vmem:[%s220 + $0x1c] sm:$0xf]
      %v246 = vunpack.c.l.bf16 %v238
      %v247 = vunpack.c.l.bf16 %v239
      %v248 = vunpack.c.l.bf16 %v240
      %v249 = vunpack.c.l.bf16 %v241
      %v250 = vunpack.c.l.bf16 %v242
      %v251 = vunpack.c.l.bf16 %v243
      %v252 = vunpack.c.l.bf16 %v244
      %v253 = vunpack.c.l.bf16 %v245
      %v254 = vld [vmem:[%s224] sm:$0x1]
      %v256 = vlaneseq
      %v257 = vshrl.u32 %v256, 7
      %v258 = vsub.s32 0, %v257
      %v259 = vrot.slane %v254, %v258
      %v261 = vmul.f32 %v246, %v259
      %v262 = vmul.f32 %v247, %v259
      %v263 = vmul.f32 %v248, %v259
      %v264 = vmul.f32 %v249, %v259
      %v265 = vmul.f32 %v250, %v259
      %v266 = vmul.f32 %v251, %v259
      %v267 = vmul.f32 %v252, %v259
      %v268 = vmul.f32 %v253, %v259
      %v269 = vld [vmem:[%s227] sm:$0x1]
      %v271 = vlaneseq
      %v272 = vshrl.u32 %v271, 7
      %v273 = vsub.s32 0, %v272
      %v274 = vrot.slane %v269, %v273
      %v276 = vadd.f32 %v261, %v274
      %v277 = vadd.f32 %v262, %v274
      %v278 = vadd.f32 %v263, %v274
      %v279 = vadd.f32 %v264, %v274
      %v280 = vadd.f32 %v265, %v274
      %v281 = vadd.f32 %v266, %v274
      %v282 = vadd.f32 %v267, %v274
      %v283 = vadd.f32 %v268, %v274
      %vm284 = vcmask 64512
      %285 = vst.msk [vmem:[%s236] sm:$0xff] %vm284, %v276
      %286 = vst.msk [vmem:[%s236 + $0x8] sm:$0xff] %vm284, %v277
      %287 = vst.msk [vmem:[%s236 + $0x10] sm:$0xff] %vm284, %v278
      %288 = vst.msk [vmem:[%s236 + $0x18] sm:$0xff] %vm284, %v279
      %289 = vst.msk [vmem:[%s236 + $0x20] sm:$0xff] %vm284, %v280
      %290 = vst.msk [vmem:[%s236 + $0x28] sm:$0xff] %vm284, %v281
      %291 = vst.msk [vmem:[%s236 + $0x30] sm:$0xff] %vm284, %v282
      %292 = vst.msk [vmem:[%s236 + $0x38] sm:$0xff] %vm284, %v283
      %s293 = smul.u32 8, %s19
      %p294 = scmp.lt.s32.totalorder %s18, 1
      %s295 = scalar_select %p294, %s18, 1
      %p296 = scmp.lt.s32.totalorder %s293, 7
      %s297 = scalar_select %p296, %s293, 7
      %s298 = smul.addr %s295, 8
      %s299 = sadd.s32 %s297, %s298
      %s300 = smul.addr %s299, 8
      %s301 = scalar_lea.vmem %s3, %s300
      // Predicated region
      $region33: #{conv_block_forward.3} parent=31 // pred_check
        %p302 = pneg %p126
      $region34: #{conv_block_forward.3} parent=31 // pred_check_branch
        %304 = sbr.rel (%p302) target = $region36
      $region35: #{conv_block_forward.3} parent=31 // pred_region
        %s305 = smul.u32 8, %s19
      $region36: #{conv_block_forward.3} parent=31 // pred_fallthru
        _
    $region32: #{conv_block_forward.3} parent=5 // pred_fallthru
      _
    %p306 = scmp.le.s32.totalorder 2, %s9
    // Predicated region
    $region37: #{conv_block_forward.3} parent=5 // pred_check
      %p307 = pneg %p306
    $region38: #{conv_block_forward.3} parent=5 // pred_check_branch
      %309 = sbr.rel (%p307) target = $region40
    $region39: #{conv_block_forward.3} parent=5 // pred_region
      %s310 = ssub.s32 %s9, 2
      // Predicated region
      $region41: #{conv_block_forward.3} parent=39 // pred_check
        %p311 = pneg %p132
      $region42: #{conv_block_forward.3} parent=39 // pred_check_branch
        %313 = sbr.rel (%p311) target = $region44
      $region43: #{conv_block_forward.3} parent=39 // pred_region
        %s314 = smul.u32 8, %s21
        %p315 = scmp.lt.s32.totalorder %s20, 1
        %s316 = scalar_select %p315, %s20, 1
        %p317 = scmp.lt.s32.totalorder %s314, 7
        %s318 = scalar_select %p317, %s314, 7
        %s319 = smul.addr %s316, 8
        %s320 = sadd.s32 %s318, %s319
        %s321 = smul.addr %s320, 8
        %s322 = scalar_lea.vmem %s3, %s321
      $region44: #{conv_block_forward.3} parent=39 // pred_fallthru
        _
    $region40: #{conv_block_forward.3} parent=5 // pred_fallthru
      _
  $region6: #{conv_block_forward.3} parent=0 // loop_footer
    %s13 = sadd.s32 1, %s9
  $region7: #{conv_block_forward.3} parent=0 // loop_footer_branch
    %8 = sbr.rel target = $region3
  $region8: #{conv_block_forward.3} parent=0 // loop_exit
    _

// kernel: conv_block_forward.2
$region0: #{conv_block_forward.2}
  #allocation0 [shape = 'u32[]', space=smem, size = 0x4, offset = 0x4, fixed_abs, tag = 'smem constant byte address 0x4 - core index']
  #allocation1 [shape = 'u32[144,128]{1,0:T(1,128)}', space=vmem, size = 0x12000, scoped, tag = 'internal scratch']
  %s0 = inlined_call_operand.vmem [shape: bf16[2,2,11,8,28], index: 0, kind: input, shape index: {}]
  %s1 = inlined_call_operand.vmem [shape: bf16[7,28,8], index: 1, kind: input, shape index: {}]
  %s2 = inlined_call_operand.vmem [shape: f32[1,8], index: 2, kind: input, shape index: {}]
  %s3 = inlined_call_operand.vmem [shape: bf16[2,64,8], index: 3, kind: output, shape index: {0}]
  %s4 = inlined_call_operand.vmem [shape: f32[2,1,8], index: 4, kind: output, shape index: {1}]
  %s5 = inlined_call_operand.vmem [shape: f32[2,1,8], index: 5, kind: output, shape index: {2}]
  %6 = xla_tuple %s3, %s4, %s5
  %s7 = sld [smem:[#allocation0]]
  $region61: #{conv_block_forward.2} parent=0
    _
  %s9 = ssub.s32 1, %s7
  %s10 = scalar_select 0, %s9, %s7
  loop: start=0, step=1, limit=4
  $region2: #{conv_block_forward.2} parent=0 // loop_pre_header
    _
  $region3: #{conv_block_forward.2} parent=0 // loop_header
    %s12 = sphi 0, %s16
    %p13 = scmp.ge.s32.totalorder %s12, 4
    %s22 = sphi 0, %s24
    %s25 = sphi 0, %s22
    %s26 = sphi 0, %s25
    %s42 = sphi 0, %s26
    %s46 = sphi 0, %s46
    %s48 = sphi 0, %s46
    %s49 = sphi 0, %s48
    %s63 = sphi 0, %s49
    %s67 = sphi 0, %s67
    %s69 = sphi 0, %s67
    %s70 = sphi 0, %s69
    %s84 = sphi 0, %s70
    %s90 = sphi 0, %s92
    %s93 = sphi 0, %s90
    %s94 = sphi 0, %s93
    %s110 = sphi 0, %s94
    %s116 = sphi 0, %s118
    %s119 = sphi 0, %s116
    %s120 = sphi 0, %s119
    %s136 = sphi 0, %s120
    %s142 = sphi 0, %s144
    %s145 = sphi 0, %s142
    %s146 = sphi 0, %s145
    %s162 = sphi 0, %s146
  $region4: #{conv_block_forward.2} parent=0 // loop_header_branch
    %15 = sbr.rel (%p13) target = $region8
  $region5: #{conv_block_forward.2} parent=0 // loop_body
    %s17 = ssub.s32 %s12, 1
    %s18 = ssub.s32 %s12, 2
    %s19 = sadd.s32 %s12, 1
    %s20 = ssub.s32 %s12, %s19
    %p21 = scmp.eq.s32.totalorder %s20, 0
    %s23 = sadd.s32 %s22, 1
    %s24 = scalar_select %p21, %s22, %s23
    %p27 = pneg %p21
    %p28 = scmp.eq.s32.totalorder %s12, 1
    %p29 = por %p27, %p28
    %p30 = scmp.ne.s32.totalorder %s22, %s25
    %p31 = scmp.eq.s32.totalorder %s12, 0
    %p32 = por %p30, %p31
    %p33 = scmp.ne.s32.totalorder %s22, %s25
    %p34 = scmp.eq.s32.totalorder %s17, 1
    %p35 = por %p33, %p34
    %p36 = scmp.ne.s32.totalorder %s25, %s26
    %p37 = scmp.eq.s32.totalorder %s17, 0
    %p38 = por %p36, %p37
    %p39 = scmp.ne.s32.totalorder %s25, %s26
    %p40 = scmp.eq.s32.totalorder %s18, 1
    %p41 = por %p39, %p40
    %p43 = scmp.ne.s32.totalorder %s26, %s42
    %p44 = scmp.eq.s32.totalorder %s18, 0
    %p45 = por %p43, %p44
    %s47 = sadd.s32 %s46, 1
    %p50 = scmp.eq.s32.totalorder %s12, 1
    %p51 = scmp.ne.s32.totalorder %s46, %s48
    %p52 = scmp.eq.s32.totalorder %s12, 0
    %p53 = por %p51, %p52
    %p54 = scmp.ne.s32.totalorder %s46, %s48
    %p55 = scmp.eq.s32.totalorder %s17, 1
    %p56 = por %p54, %p55
    %p57 = scmp.ne.s32.totalorder %s48, %s49
    %p58 = scmp.eq.s32.totalorder %s17, 0
    %p59 = por %p57, %p58
    %p60 = scmp.ne.s32.totalorder %s48, %s49
    %p61 = scmp.eq.s32.totalorder %s18, 1
    %p62 = por %p60, %p61
    %p64 = scmp.ne.s32.totalorder %s49, %s63
    %p65 = scmp.eq.s32.totalorder %s18, 0
    %p66 = por %p64, %p65
    %s68 = sadd.s32 %s67, 1
    %p71 = scmp.eq.s32.totalorder %s12, 1
    %p72 = scmp.ne.s32.totalorder %s67, %s69
    %p73 = scmp.eq.s32.totalorder %s12, 0
    %p74 = por %p72, %p73
    %p75 = scmp.ne.s32.totalorder %s67, %s69
    %p76 = scmp.eq.s32.totalorder %s17, 1
    %p77 = por %p75, %p76
    %p78 = scmp.ne.s32.totalorder %s69, %s70
    %p79 = scmp.eq.s32.totalorder %s17, 0
    %p80 = por %p78, %p79
    %p81 = scmp.ne.s32.totalorder %s69, %s70
    %p82 = scmp.eq.s32.totalorder %s18, 1
    %p83 = por %p81, %p82
    %p85 = scmp.ne.s32.totalorder %s70, %s84
    %p86 = scmp.eq.s32.totalorder %s18, 0
    %p87 = por %p85, %p86
    %s88 = ssub.s32 %s12, %s19
    %p89 = scmp.eq.s32.totalorder %s88, 0
    %s91 = sadd.s32 %s90, 1
    %s92 = scalar_select %p89, %s90, %s91
    %p95 = pneg %p89
    %p96 = scmp.eq.s32.totalorder %s12, 1
    %p97 = por %p95, %p96
    %p98 = scmp.ne.s32.totalorder %s90, %s93
    %p99 = scmp.eq.s32.totalorder %s12, 0
    %p100 = por %p98, %p99
    %p101 = scmp.ne.s32.totalorder %s90, %s93
    %p102 = scmp.eq.s32.totalorder %s17, 1
    %p103 = por %p101, %p102
    %p104 = scmp.ne.s32.totalorder %s93, %s94
    %p105 = scmp.eq.s32.totalorder %s17, 0
    %p106 = por %p104, %p105
    %p107 = scmp.ne.s32.totalorder %s93, %s94
    %p108 = scmp.eq.s32.totalorder %s18, 1
    %p109 = por %p107, %p108
    %p111 = scmp.ne.s32.totalorder %s94, %s110
    %p112 = scmp.eq.s32.totalorder %s18, 0
    %p113 = por %p111, %p112
    %s114 = ssub.s32 %s12, %s19
    %p115 = scmp.eq.s32.totalorder %s114, 0
    %s117 = sadd.s32 %s116, 1
    %s118 = scalar_select %p115, %s116, %s117
    %p121 = pneg %p115
    %p122 = scmp.eq.s32.totalorder %s12, 1
    %p123 = por %p121, %p122
    %p124 = scmp.ne.s32.totalorder %s116, %s119
    %p125 = scmp.eq.s32.totalorder %s12, 0
    %p126 = por %p124, %p125
    %p127 = scmp.ne.s32.totalorder %s116, %s119
    %p128 = scmp.eq.s32.totalorder %s17, 1
    %p129 = por %p127, %p128
    %p130 = scmp.ne.s32.totalorder %s119, %s120
    %p131 = scmp.eq.s32.totalorder %s17, 0
    %p132 = por %p130, %p131
    %p133 = scmp.ne.s32.totalorder %s119, %s120
    %p134 = scmp.eq.s32.totalorder %s18, 1
    %p135 = por %p133, %p134
    %p137 = scmp.ne.s32.totalorder %s120, %s136
    %p138 = scmp.eq.s32.totalorder %s18, 0
    %p139 = por %p137, %p138
    %s140 = ssub.s32 %s12, %s19
    %p141 = scmp.eq.s32.totalorder %s140, 0
    %s143 = sadd.s32 %s142, 1
    %s144 = scalar_select %p141, %s142, %s143
    %p147 = pneg %p141
    %p148 = scmp.eq.s32.totalorder %s12, 1
    %p149 = por %p147, %p148
    %p150 = scmp.ne.s32.totalorder %s142, %s145
    %p151 = scmp.eq.s32.totalorder %s12, 0
    %p152 = por %p150, %p151
    %p153 = scmp.ne.s32.totalorder %s142, %s145
    %p154 = scmp.eq.s32.totalorder %s17, 1
    %p155 = por %p153, %p154
    %p156 = scmp.ne.s32.totalorder %s145, %s146
    %p157 = scmp.eq.s32.totalorder %s17, 0
    %p158 = por %p156, %p157
    %p159 = scmp.ne.s32.totalorder %s145, %s146
    %p160 = scmp.eq.s32.totalorder %s18, 1
    %p161 = por %p159, %p160
    %p163 = scmp.ne.s32.totalorder %s146, %s162
    %p164 = scmp.eq.s32.totalorder %s18, 0
    %p165 = por %p163, %p164
    %p166 = scmp.le.s32.totalorder 1, %s12
    %p167 = scmp.lt.s32.totalorder %s12, 3
    %p168 = pnand %p166, %p167
    %p169 = pneg %p168
    // Predicated region
    $region9: #{conv_block_forward.2} parent=5 // pred_check
      _
    $region10: #{conv_block_forward.2} parent=5 // pred_check_branch
      %171 = sbr.rel (%p168) target = $region12
    $region11: #{conv_block_forward.2} parent=5 // pred_region
      %s172 = ssub.s32 %s12, 1
      // Predicated region
      $region13: #{conv_block_forward.2} parent=11 // pred_check
        %p173 = pneg %p59
      $region14: #{conv_block_forward.2} parent=11 // pred_check_branch
        %175 = sbr.rel (%p173) target = $region16
      $region15: #{conv_block_forward.2} parent=11 // pred_region
        _
      $region16: #{conv_block_forward.2} parent=11 // pred_fallthru
        _
      // Predicated region
      $region17: #{conv_block_forward.2} parent=11 // pred_check
        %p176 = pneg %p80
      $region18: #{conv_block_forward.2} parent=11 // pred_check_branch
        %178 = sbr.rel (%p176) target = $region20
      $region19: #{conv_block_forward.2} parent=11 // pred_region
        _
      $region20: #{conv_block_forward.2} parent=11 // pred_fallthru
        _
    $region12: #{conv_block_forward.2} parent=5 // pred_fallthru
      _
    %p179 = scmp.lt.s32.totalorder %s12, 2
    // Predicated region
    $region21: #{conv_block_forward.2} parent=5 // pred_check
      %p180 = pneg %p179
    $region22: #{conv_block_forward.2} parent=5 // pred_check_branch
      %182 = sbr.rel (%p180) target = $region24
    $region23: #{conv_block_forward.2} parent=5 // pred_region
      // Predicated region
      $region25: #{conv_block_forward.2} parent=23 // pred_check
        %p183 = pneg %p32
      $region26: #{conv_block_forward.2} parent=23 // pred_check_branch
        %185 = sbr.rel (%p183) target = $region28
      $region27: #{conv_block_forward.2} parent=23 // pred_region
        %p186 = scmp.lt.s32.totalorder %s12, 1
        %s187 = scalar_select %p186, %s12, 1
        %s188 = smul.addr %s187, 22
        %s189 = smul.addr %s188, 4
        %s190 = scalar_lea.vmem %s0, %s189
      $region28: #{conv_block_forward.2} parent=23 // pred_fallthru
        _
    $region24: #{conv_block_forward.2} parent=5 // pred_fallthru
      _
    %p191 = scmp.le.s32.totalorder 1, %s12
    %p192 = scmp.lt.s32.totalorder %s12, 3
    %p193 = pnand %p191, %p192
    %p194 = pneg %p193
    // Predicated region
    $region29: #{conv_block_forward.2} parent=5 // pred_check
      _
    $region30: #{conv_block_forward.2} parent=5 // pred_check_branch
      %196 = sbr.rel (%p193) target = $region32
    $region31: #{conv_block_forward.2} parent=5 // pred_region
      %s197 = ssub.s32 %s12, 1
      %p198 = scmp.lt.s32.totalorder %s17, 1
      %s199 = scalar_select %p198, %s17, 1
      %s200 = smul.addr %s199, 22
      %s201 = smul.addr %s200, 4
      %s202 = scalar_lea.vmem %s0, %s201
      %p203 = pneg %p38
      %p204 = pneg %p35
      %p205 = pneg %p59
      %p206 = pneg %p56
      %p207 = pneg %p80
      %p208 = pneg %p77
      %p209 = pneg %p106
      %p210 = pneg %p103
      %p211 = scmp.lt.s32.totalorder %s17, 1
      %s212 = scalar_select %p211, %s17, 1
      %s213 = smul.addr %s212, 8
      %s214 = smul.addr %s213, 4
      %s215 = scalar_lea.vmem %s3, %s214
      %p216 = pneg %p132
      %p217 = pneg %p129
      %p218 = scmp.lt.s32.totalorder %s17, 1
      %s219 = scalar_select %p218, %s17, 1
      %s220 = scalar_lea.vmem %s4, %s219
      %p221 = pneg %p158
      %p222 = pneg %p155
      %p223 = scmp.lt.s32.totalorder %s17, 1
      %s224 = scalar_select %p223, %s17, 1
      %s225 = scalar_lea.vmem %s5, %s224
      %p226 = scmp.lt.s32.totalorder %s17, 1
      %s227 = scalar_select %p226, %s17, 1
      %s228 = smul.addr %s227, 22
      %s229 = smul.addr %s228, 4
      %s230 = scalar_lea.vmem %s0, %s229
      %p231 = scmp.lt.s32.totalorder %s17, 1
      %s232 = scalar_select %p231, %s17, 1
      %s233 = smul.addr %s232, 8
      %s234 = smul.addr %s233, 4
      %s235 = scalar_lea.vmem %s3, %s234
      %p236 = scmp.lt.s32.totalorder %s17, 1
      %s237 = scalar_select %p236, %s17, 1
      %s238 = scalar_lea.vmem %s4, %s237
      %p239 = scmp.lt.s32.totalorder %s17, 1
      %s240 = scalar_select %p239, %s17, 1
      %s241 = scalar_lea.vmem %s5, %s240
      %v243 = vld [vmem:[%s2] sm:$0x1]
      %v245 = vlaneseq
      %v246 = vshrl.u32 %v245, 7
      %v247 = vsub.s32 0, %v246
      %v248 = vrot.slane %v243, %v247
      %v250 = vld [vmem:[%s230] sm:$0xf]
      %v251 = vld [vmem:[%s230 + $0x4] sm:$0xf]
      %v252 = vld [vmem:[%s230 + $0x8] sm:$0xf]
      %v253 = vld [vmem:[%s230 + $0xc] sm:$0xf]
      %v254 = vld [vmem:[%s230 + $0x10] sm:$0xf]
      %v255 = vld [vmem:[%s230 + $0x14] sm:$0xf]
      %v256 = vld [vmem:[%s230 + $0x18] sm:$0xf]
      %v257 = vld [vmem:[%s230 + $0x1c] sm:$0xf]
      %v258 = vld [vmem:[%s1] sm:$0xf]
      %v259 = vld [vmem:[%s1 + $0x4] sm:$0xf]
      %v260 = vld [vmem:[%s1 + $0x8] sm:$0xf]
      %v261 = vld [vmem:[%s1 + $0xc] sm:$0x3]
      %v270 = vunpack.c.l.b16 %v250
      %v271 = vunpack.c.l.b16 %v251
      %v272 = vunpack.c.l.b16 %v252
      %v273 = vunpack.c.l.b16 %v253
      %v274 = vunpack.c.l.b16 %v254
      %v275 = vunpack.c.l.b16 %v255
      %v276 = vunpack.c.l.b16 %v256
      %v277 = vunpack.c.l.b16 %v257
      %v278 = vpack.c.b16 %v271, %v270
      %v279 = vpack.c.b16 %v273, %v272
      %v280 = vpack.c.b16 %v275, %v274
      %v281 = vpack.c.b16 %v277, %v276
      %v286 = vunpack.c.l.b16 %v258
      %v287 = vunpack.c.l.b16 %v259
      %v288 = vunpack.c.l.b16 %v260
      %v289 = vunpack.c.l.b16 %v261
      %v290 = vpack.c.b16 %v287, %v286
      %v291 = vpack.c.b16 %v289, %v288
      %vm293 = vcmask 228352
      %v295 = vsel %vm293, %v278, 0
      %v298 = vsel %vm293, %v279, 0
      %v301 = vsel %vm293, %v280, 0
      %v304 = vsel %vm293, %v281, 0
      %vm306 = vcmask 1045504
      %v308 = vsel %vm306, %v291, 0
      %310 = vmatprep.subr.bf16.mxu0 0
      %311 = vmatpush1.bf16.msra.mxu0 %v290
      %312 = vmatprep.subr.bf16.mxu0 0
      %313 = vmatpush1.bf16.msra.mxu0 %v308
      %314 = vmatprep.subr.bf16.mxu0 0
      %315 = vmatpush1.bf16.msra.mxu0 0
      %316 = vmatprep.subr.bf16.mxu0 0
      %317 = vmatpush1.bf16.msra.mxu0 0
      %318 = vmatprep.subr.bf16.mxu0 0
      %319 = vmatpush1.bf16.msra.mxu0 0
      %320 = vmatprep.subr.bf16.mxu0 0
      %321 = vmatpush1.bf16.msra.mxu0 0
      %322 = vmatprep.subr.bf16.mxu0 0
      %323 = vmatpush1.bf16.msra.mxu0 0
      %324 = vmatprep.subr.bf16.mxu0 0
      %325 = vmatpush1.bf16.msra.mxu0 0
      %326 = vmatprep.subr.bf16.mxu0 0
      %327 = vmatpush1.bf16.msra.mxu0 0
      %328 = vmatprep.subr.bf16.mxu0 0
      %329 = vmatpush1.bf16.msra.mxu0 0
      %330 = vmatprep.subr.bf16.mxu0 0
      %331 = vmatpush1.bf16.msra.mxu0 0
      %332 = vmatprep.subr.bf16.mxu0 0
      %333 = vmatpush1.bf16.msra.mxu0 0
      %334 = vmatprep.subr.bf16.mxu0 0
      %335 = vmatpush1.bf16.msra.mxu0 0
      %336 = vmatprep.subr.bf16.mxu0 0
      %337 = vmatpush1.bf16.msra.mxu0 0
      %338 = vmatprep.subr.bf16.mxu0 0
      %339 = vmatpush1.bf16.msra.mxu0 0
      %340 = vmatprep.subr.bf16.mxu0 0
      %341 = vmatpush1.bf16.msra.mxu0 0
      %342 = vmatprep.mubr.bf16.mxu0 0
      %343 = vmatmul.mubr.bf16.gmra.mrb[0].mxu0 %v295
      %v344 = vpop.f32.mrb[0].mxu0
      %v345 = vadd.f32 0.0, %v344
      %v346 = vpop.f32.mrb[0].mxu0
      %v347 = vpop.f32.mrb[0].mxu0
      %v348 = vadd.f32 0.0, %v347
      %v349 = vpop.f32.mrb[0].mxu0
      %350 = vmatprep.mubr.bf16.mxu0 0
      %351 = vmatmul.mubr.bf16.gmra.mrb[0].mxu0 %v298
      %v352 = vpop.f32.mrb[0].mxu0
      %v353 = vadd.f32 0.0, %v352
      %v354 = vpop.f32.mrb[0].mxu0
      %v355 = vpop.f32.mrb[0].mxu0
      %v356 = vadd.f32 0.0, %v355
      %v357 = vpop.f32.mrb[0].mxu0
      %358 = vmatprep.mubr.bf16.mxu0 0
      %359 = vmatmul.mubr.bf16.gmra.mrb[0].mxu0 %v301
      %v360 = vpop.f32.mrb[0].mxu0
      %v361 = vadd.f32 0.0, %v360
      %v362 = vpop.f32.mrb[0].mxu0
      %v363 = vpop.f32.mrb[0].mxu0
      %v364 = vadd.f32 0.0, %v363
      %v365 = vpop.f32.mrb[0].mxu0
      %366 = vmatprep.mubr.bf16.mxu0 0
      %367 = vmatmul.mubr.bf16.gmra.mrb[0].mxu0 %v304
      %v368 = vpop.f32.mrb[0].mxu0
      %v369 = vadd.f32 0.0, %v368
      %v370 = vpop.f32.mrb[0].mxu0
      %v371 = vpop.f32.mrb[0].mxu0
      %v372 = vadd.f32 0.0, %v371
      %v373 = vpop.f32.mrb[0].mxu0
      %374 = vdwg.mxu0
      %v375 = vadd.f32 %v248, %v345
      %v376 = vadd.f32 %v248, %v348
      %v377 = vadd.f32 %v248, %v353
      %v378 = vadd.f32 %v248, %v356
      %v379 = vadd.f32 %v248, %v361
      %v380 = vadd.f32 %v248, %v364
      %v381 = vadd.f32 %v248, %v369
      %v382 = vadd.f32 %v248, %v372
      %s383 = scalar_lea.vmem %s230, 4
      %v384 = vld [vmem:[%s383] sm:$0xf]
      %v385 = vld [vmem:[%s383 + $0x4] sm:$0xf]
      %v386 = vld [vmem:[%s383 + $0x8] sm:$0xf]
      %v387 = vld [vmem:[%s383 + $0xc] sm:$0xf]
      %v388 = vld [vmem:[%s383 + $0x10] sm:$0xf]
      %v389 = vld [vmem:[%s383 + $0x14] sm:$0xf]
      %v390 = vld [vmem:[%s383 + $0x18] sm:$0xf]
      %v391 = vld [vmem:[%s383 + $0x1c] sm:$0xf]
      %s392 = scalar_lea.vmem %s1, 32
      %v393 = vld [vmem:[%s392] sm:$0xf]
      %v394 = vld [vmem:[%s392 + $0x4] sm:$0xf]
      %v395 = vld [vmem:[%s392 + $0x8] sm:$0xf]
      %v396 = vld [vmem:[%s392 + $0xc] sm:$0x3]
      %v405 = vunpack.c.l.b16 %v384
      %v406 = vunpack.c.l.b16 %v385
      %v407 = vunpack.c.l.b16 %v386
      %v408 = vunpack.c.l.b16 %v387
      %v409 = vunpack.c.l.b16 %v388
      %v410 = vunpack.c.l.b16 %v389
      %v411 = vunpack.c.l.b16 %v390
      %v412 = vunpack.c.l.b16 %v391
      %v413 = vpack.c.b16 %v406, %v405
      %v414 = vpack.c.b16 %v408, %v407
      %v415 = vpack.c.b16 %v410, %v409
      %v416 = vpack.c.b16 %v412, %v411
      %v421 = vunpack.c.l.b16 %v393
      %v422 = vunpack.c.l.b16 %v394
      %v423 = vunpack.c.l.b16 %v395
      %v424 = vunpack.c.l.b16 %v396
      %v425 = vpack.c.b16 %v422, %v421
      %v426 = vpack.c.b16 %v424, %v423
      %v429 = vsel %vm293, %v413, 0
      %v432 = vsel %vm293, %v414, 0
      %v435 = vsel %vm293, %v415, 0
      %v438 = vsel %vm293, %v416, 0
      %v441 = vsel %vm306, %v426, 0
      %443 = vmatprep.subr.bf16.mxu0 0
      %444 = vmatpush1.bf16.msra.mxu0 %v425
      %445 = vmatprep.subr.bf16.mxu0 0
      %446 = vmatpush1.bf16.msra.mxu0 %v441
      %447 = vmatprep.subr.bf16.mxu0 0
      %448 = vmatpush1.bf16.msra.mxu0 0
      %449 = vmatprep.subr.bf16.mxu0 0
      %450 = vmatpush1.bf16.msra.mxu0 0
      %451 = vmatprep.subr.bf16.mxu0 0
      %452 = vmatpush1.bf16.msra.mxu0 0
      %453 = vmatprep.subr.bf16.mxu0 0
      %454 = vmatpush1.bf16.msra.mxu0 0
      %455 = vmatprep.subr.bf16.mxu0 0
      %456 = vmatpush1.bf16.msra.mxu0 0
      %457 = vmatprep.subr.bf16.mxu0 0
      %458 = vmatpush1.bf16.msra.mxu0 0
      %459 = vmatprep.subr.bf16.mxu0 0
      %460 = vmatpush1.bf16.msra.mxu0 0
      %461 = vmatprep.subr.bf16.mxu0 0
      %462 = vmatpush1.bf16.msra.mxu0 0
      %463 = vmatprep.subr.bf16.mxu0 0
      %464 = vmatpush1.bf16.msra.mxu0 0
      %465 = vmatprep.subr.bf16.mxu0 0
      %466 = vmatpush1.bf16.msra.mxu0 0
      %467 = vmatprep.subr.bf16.mxu0 0
      %468 = vmatpush1.bf16.msra.mxu0 0
      %469 = vmatprep.subr.bf16.mxu0 0
      %470 = vmatpush1.bf16.msra.mxu0 0
      %471 = vmatprep.subr.bf16.mxu0 0
      %472 = vmatpush1.bf16.msra.mxu0 0
      %473 = vmatprep.subr.bf16.mxu0 0
      %474 = vmatpush1.bf16.msra.mxu0 0
      %475 = vmatprep.mubr.bf16.mxu0 0
      %476 = vmatmul.mubr.bf16.gmra.mrb[0].mxu0 %v429
      %v477 = vpop.f32.mrb[0].mxu0
      %v478 = vadd.f32 0.0, %v477
      %v479 = vpop.f32.mrb[0].mxu0
      %v480 = vpop.f32.mrb[0].mxu0
      %v481 = vadd.f32 0.0, %v480
      %v482 = vpop.f32.mrb[0].mxu0
      %483 = vmatprep.mubr.bf16.mxu0 0
      %484 = vmatmul.mubr.bf16.gmra.mrb[0].mxu0 %v432
      %v485 = vpop.f32.mrb[0].mxu0
      %v486 = vadd.f32 0.0, %v485
      %v487 = vpop.f32.mrb[0].mxu0
      %v488 = vpop.f32.mrb[0].mxu0
      %v489 = vadd.f32 0.0, %v488
      %v490 = vpop.f32.mrb[0].mxu0
      %491 = vmatprep.mubr.bf16.mxu0 0
      %492 = vmatmul.mubr.bf16.gmra.mrb[0].mxu0 %v435
      %v493 = vpop.f32.mrb[0].mxu0
      %v494 = vadd.f32 0.0, %v493
      %v495 = vpop.f32.mrb[0].mxu0
      %v496 = vpop.f32.mrb[0].mxu0
      %v497 = vadd.f32 0.0, %v496
      %v498 = vpop.f32.mrb[0].mxu0
      %499 = vmatprep.mubr.bf16.mxu0 0
      %500 = vmatmul.mubr.bf16.gmra.mrb[0].mxu0 %v438
      %v501 = vpop.f32.mrb[0].mxu0
      %v502 = vadd.f32 0.0, %v501
      %v503 = vpop.f32.mrb[0].mxu0
      %v504 = vpop.f32.mrb[0].mxu0
      %v505 = vadd.f32 0.0, %v504
      %v506 = vpop.f32.mrb[0].mxu0
      %507 = vdwg.mxu0
      %v508 = vadd.f32 %v375, %v478
      %v509 = vadd.f32 %v376, %v481
      %v510 = vadd.f32 %v377, %v486
      %v511 = vadd.f32 %v378, %v489
      %v512 = vadd.f32 %v379, %v494
      %v513 = vadd.f32 %v380, %v497
      %v514 = vadd.f32 %v381, %v502
      %v515 = vadd.f32 %v382, %v505
      %s516 = scalar_lea.vmem %s230, 8
      %v517 = vld [vmem:[%s516] sm:$0xf]
      %v518 = vld [vmem:[%s516 + $0x4] sm:$0xf]
      %v519 = vld [vmem:[%s516 + $0x8] sm:$0xf]
      %v520 = vld [vmem:[%s516 + $0xc] sm:$0xf]
      %v521 = vld [vmem:[%s516 + $0x10] sm:$0xf]
      %v522 = vld [vmem:[%s516 + $0x14] sm:$0xf]
      %v523 = vld [vmem:[%s516 + $0x18] sm:$0xf]
      %v524 = vld [vmem:[%s516 + $0x1c] sm:$0xf]
      %s525 = scalar_lea.vmem %s1, 64
      %v526 = vld [vmem:[%s525] sm:$0xf]
      %v527 = vld [vmem:[%s525 + $0x4] sm:$0xf]
      %v528 = vld [vmem:[%s525 + $0x8] sm:$0xf]
      %v529 = vld [vmem:[%s525 + $0xc] sm:$0x3]
      %v538 = vunpack.c.l.b16 %v517
      %v539 = vunpack.c.l.b16 %v518
      %v540 = vunpack.c.l.b16 %v519
      %v541 = vunpack.c.l.b16 %v520
      %v542 = vunpack.c.l.b16 %v521
      %v543 = vunpack.c.l.b16 %v522
      %v544 = vunpack.c.l.b16 %v523
      %v545 = vunpack.c.l.b16 %v524
      %v546 = vpack.c.b16 %v539, %v538
      %v547 = vpack.c.b16 %v541, %v540
      %v548 = vpack.c.b16 %v543, %v542
      %v549 = vpack.c.b16 %v545, %v544
      %v554 = vunpack.c.l.b16 %v526
      %v555 = vunpack.c.l.b16 %v527
      %v556 = vunpack.c.l.b16 %v528
      %v557 = vunpack.c.l.b16 %v529
      %v558 = vpack.c.b16 %v555, %v554
      %v559 = vpack.c.b16 %v557, %v556
      %v562 = vsel %vm293, %v546, 0
      %v565 = vsel %vm293, %v547, 0
      %v568 = vsel %vm293, %v548, 0
      %v571 = vsel %vm293, %v549, 0
      %v574 = vsel %vm306, %v559, 0
      %576 = vmatprep.subr.bf16.mxu0 0
      %577 = vmatpush1.bf16.msra.mxu0 %v558
      %578 = vmatprep.subr.bf16.mxu0 0
      %579 = vmatpush1.bf16.msra.mxu0 %v574
      %580 = vmatprep.subr.bf16.mxu0 0
      %581 = vmatpush1.bf16.msra.mxu0 0
      %582 = vmatprep.subr.bf16.mxu0 0
      %583 = vmatpush1.bf16.msra.mxu0 0
      %584 = vmatprep.subr.bf16.mxu0 0
      %585 = vmatpush1.bf16.msra.mxu0 0
      %586 = vmatprep.subr.bf16.mxu0 0
      %587 = vmatpush1.bf16.msra.mxu0 0
      %588 = vmatprep.subr.bf16.mxu0 0
      %589 = vmatpush1.bf16.msra.mxu0 0
      %590 = vmatprep.subr.bf16.mxu0 0
      %591 = vmatpush1.bf16.msra.mxu0 0
      %592 = vmatprep.subr.bf16.mxu0 0
      %593 = vmatpush1.bf16.msra.mxu0 0
      %594 = vmatprep.subr.bf16.mxu0 0
      %595 = vmatpush1.bf16.msra.mxu0 0
      %596 = vmatprep.subr.bf16.mxu0 0
      %597 = vmatpush1.bf16.msra.mxu0 0
      %598 = vmatprep.subr.bf16.mxu0 0
      %599 = vmatpush1.bf16.msra.mxu0 0
      %600 = vmatprep.subr.bf16.mxu0 0
      %601 = vmatpush1.bf16.msra.mxu0 0
      %602 = vmatprep.subr.bf16.mxu0 0
      %603 = vmatpush1.bf16.msra.mxu0 0
      %604 = vmatprep.subr.bf16.mxu0 0
      %605 = vmatpush1.bf16.msra.mxu0 0
      %606 = vmatprep.subr.bf16.mxu0 0
      %607 = vmatpush1.bf16.msra.mxu0 0
      %608 = vmatprep.mubr.bf16.mxu0 0
      %609 = vmatmul.mubr.bf16.gmra.mrb[0].mxu0 %v562
      %v610 = vpop.f32.mrb[0].mxu0
      %v611 = vadd.f32 0.0, %v610
      %v612 = vpop.f32.mrb[0].mxu0
      %v613 = vpop.f32.mrb[0].mxu0
      %v614 = vadd.f32 0.0, %v613
      %v615 = vpop.f32.mrb[0].mxu0
      %616 = vmatprep.mubr.bf16.mxu0 0
      %617 = vmatmul.mubr.bf16.gmra.mrb[0].mxu0 %v565
      %v618 = vpop.f32.mrb[0].mxu0
      %v619 = vadd.f32 0.0, %v618
      %v620 = vpop.f32.mrb[0].mxu0
      %v621 = vpop.f32.mrb[0].mxu0
      %v622 = vadd.f32 0.0, %v621
      %v623 = vpop.f32.mrb[0].mxu0
      %624 = vmatprep.mubr.bf16.mxu0 0
      %625 = vmatmul.mubr.bf16.gmra.mrb[0].mxu0 %v568
      %v626 = vpop.f32.mrb[0].mxu0
      %v627 = vadd.f32 0.0, %v626
      %v628 = vpop.f32.mrb[0].mxu0
      %v629 = vpop.f32.mrb[0].mxu0
      %v630 = vadd.f32 0.0, %v629
      %v631 = vpop.f32.mrb[0].mxu0
      %632 = vmatprep.mubr.bf16.mxu0 0
      %633 = vmatmul.mubr.bf16.gmra.mrb[0].mxu0 %v571
      %v634 = vpop.f32.mrb[0].mxu0
      %v635 = vadd.f32 0.0, %v634
      %v636 = vpop.f32.mrb[0].mxu0
      %v637 = vpop.f32.mrb[0].mxu0
      %v638 = vadd.f32 0.0, %v637
      %v639 = vpop.f32.mrb[0].mxu0
      %640 = vdwg.mxu0
      %v641 = vadd.f32 %v508, %v611
      %v642 = vadd.f32 %v509, %v614
      %v643 = vadd.f32 %v510, %v619
      %v644 = vadd.f32 %v511, %v622
      %v645 = vadd.f32 %v512, %v627
      %v646 = vadd.f32 %v513, %v630
      %v647 = vadd.f32 %v514, %v635
      %v648 = vadd.f32 %v515, %v638
      %s649 = scalar_lea.vmem %s230, 12
      %v650 = vld [vmem:[%s649] sm:$0xf]
      %v651 = vld [vmem:[%s649 + $0x4] sm:$0xf]
      %v652 = vld [vmem:[%s649 + $0x8] sm:$0xf]
      %v653 = vld [vmem:[%s649 + $0xc] sm:$0xf]
      %v654 = vld [vmem:[%s649 + $0x10] sm:$0xf]
      %v655 = vld [vmem:[%s649 + $0x14] sm:$0xf]
      %v656 = vld [vmem:[%s649 + $0x18] sm:$0xf]
      %v657 = vld [vmem:[%s649 + $0x1c] sm:$0xf]
      %s658 = scalar_lea.vmem %s1, 96
      %v659 = vld [vmem:[%s658] sm:$0xf]
      %v660 = vld [vmem:[%s658 + $0x4] sm:$0xf]
      %v661 = vld [vmem:[%s658 + $0x8] sm:$0xf]
      %v662 = vld [vmem:[%s658 + $0xc] sm:$0x3]
      %v671 = vunpack.c.l.b16 %v650
      %v672 = vunpack.c.l.b16 %v651
      %v673 = vunpack.c.l.b16 %v652
      %v674 = vunpack.c.l.b16 %v653
      %v675 = vunpack.c.l.b16 %v654
      %v676 = vunpack.c.l.b16 %v655
      %v677 = vunpack.c.l.b16 %v656
      %v678 = vunpack.c.l.b16 %v657
      %v679 = vpack.c.b16 %v672, %v671
      %v680 = vpack.c.b16 %v674, %v673
      %v681 = vpack.c.b16 %v676, %v675
      %v682 = vpack.c.b16 %v678, %v677
      %v687 = vunpack.c.l.b16 %v659
      %v688 = vunpack.c.l.b16 %v660
      %v689 = vunpack.c.l.b16 %v661
      %v690 = vunpack.c.l.b16 %v662
      %v691 = vpack.c.b16 %v688, %v687
      %v692 = vpack.c.b16 %v690, %v689
      %v695 = vsel %vm293, %v679, 0
      %v698 = vsel %vm293, %v680, 0
      %v701 = vsel %vm293, %v681, 0
      %v704 = vsel %vm293, %v682, 0
      %v707 = vsel %vm306, %v692, 0
      %709 = vmatprep.subr.bf16.mxu0 0
      %710 = vmatpush1.bf16.msra.mxu0 %v691
      %711 = vmatprep.subr.bf16.mxu0 0
      %712 = vmatpush1.bf16.msra.mxu0 %v707
      %713 = vmatprep.subr.bf16.mxu0 0
      %714 = vmatpush1.bf16.msra.mxu0 0
      %715 = vmatprep.subr.bf16.mxu0 0
      %716 = vmatpush1.bf16.msra.mxu0 0
      %717 = vmatprep.subr.bf16.mxu0 0
      %718 = vmatpush1.bf16.msra.mxu0 0
      %719 = vmatprep.subr.bf16.mxu0 0
      %720 = vmatpush1.bf16.msra.mxu0 0
      %721 = vmatprep.subr.bf16.mxu0 0
      %722 = vmatpush1.bf16.msra.mxu0 0
      %723 = vmatprep.subr.bf16.mxu0 0
      %724 = vmatpush1.bf16.msra.mxu0 0
      %725 = vmatprep.subr.bf16.mxu0 0
      %726 = vmatpush1.bf16.msra.mxu0 0
      %727 = vmatprep.subr.bf16.mxu0 0
      %728 = vmatpush1.bf16.msra.mxu0 0
      %729 = vmatprep.subr.bf16.mxu0 0
      %730 = vmatpush1.bf16.msra.mxu0 0
      %731 = vmatprep.subr.bf16.mxu0 0
      %732 = vmatpush1.bf16.msra.mxu0 0
      %733 = vmatprep.subr.bf16.mxu0 0
      %734 = vmatpush1.bf16.msra.mxu0 0
      %735 = vmatprep.subr.bf16.mxu0 0
      %736 = vmatpush1.bf16.msra.mxu0 0
      %737 = vmatprep.subr.bf16.mxu0 0
      %738 = vmatpush1.bf16.msra.mxu0 0
      %739 = vmatprep.subr.bf16.mxu0 0
      %740 = vmatpush1.bf16.msra.mxu0 0
      %741 = vmatprep.mubr.bf16.mxu0 0
      %742 = vmatmul.mubr.bf16.gmra.mrb[0].mxu0 %v695
      %v743 = vpop.f32.mrb[0].mxu0
      %v744 = vadd.f32 0.0, %v743
      %v745 = vpop.f32.mrb[0].mxu0
      %v746 = vpop.f32.mrb[0].mxu0
      %v747 = vadd.f32 0.0, %v746
      %v748 = vpop.f32.mrb[0].mxu0
      %749 = vmatprep.mubr.bf16.mxu0 0
      %750 = vmatmul.mubr.bf16.gmra.mrb[0].mxu0 %v698
      %v751 = vpop.f32.mrb[0].mxu0
      %v752 = vadd.f32 0.0, %v751
      %v753 = vpop.f32.mrb[0].mxu0
      %v754 = vpop.f32.mrb[0].mxu0
      %v755 = vadd.f32 0.0, %v754
      %v756 = vpop.f32.mrb[0].mxu0
      %757 = vmatprep.mubr.bf16.mxu0 0
      %758 = vmatmul.mubr.bf16.gmra.mrb[0].mxu0 %v701
      %v759 = vpop.f32.mrb[0].mxu0
      %v760 = vadd.f32 0.0, %v759
      %v761 = vpop.f32.mrb[0].mxu0
      %v762 = vpop.f32.mrb[0].mxu0
      %v763 = vadd.f32 0.0, %v762
      %v764 = vpop.f32.mrb[0].mxu0
      %765 = vmatprep.mubr.bf16.mxu0 0
      %766 = vmatmul.mubr.bf16.gmra.mrb[0].mxu0 %v704
      %v767 = vpop.f32.mrb[0].mxu0
      %v768 = vadd.f32 0.0, %v767
      %v769 = vpop.f32.mrb[0].mxu0
      %v770 = vpop.f32.mrb[0].mxu0
      %v771 = vadd.f32 0.0, %v770
      %v772 = vpop.f32.mrb[0].mxu0
      %773 = vdwg.mxu0
      %v774 = vadd.f32 %v641, %v744
      %v775 = vadd.f32 %v642, %v747
      %v776 = vadd.f32 %v643, %v752
      %v777 = vadd.f32 %v644, %v755
      %v778 = vadd.f32 %v645, %v760
      %v779 = vadd.f32 %v646, %v763
      %v780 = vadd.f32 %v647, %v768
      %v781 = vadd.f32 %v648, %v771
      %s782 = scalar_lea.vmem %s230, 44
      %v783 = vld [vmem:[%s782] sm:$0xf]
      %v784 = vld [vmem:[%s782 + $0x4] sm:$0xf]
      %v785 = vld [vmem:[%s782 + $0x8] sm:$0xf]
      %v786 = vld [vmem:[%s782 + $0xc] sm:$0xf]
      %v787 = vld [vmem:[%s782 + $0x10] sm:$0xf]
      %v788 = vld [vmem:[%s782 + $0x14] sm:$0xf]
      %v789 = vld [vmem:[%s782 + $0x18] sm:$0xf]
      %v790 = vld [vmem:[%s782 + $0x1c] sm:$0xf]
      %s791 = scalar_lea.vmem %s1, 16
      %v792 = vld [vmem:[%s791] sm:$0xf]
      %v793 = vld [vmem:[%s791 + $0x4] sm:$0xf]
      %v794 = vld [vmem:[%s791 + $0x8] sm:$0xf]
      %v795 = vld [vmem:[%s791 + $0xc] sm:$0x3]
      %v804 = vunpack.c.l.b16 %v783
      %v805 = vunpack.c.l.b16 %v784
      %v806 = vunpack.c.l.b16 %v785
      %v807 = vunpack.c.l.b16 %v786
      %v808 = vunpack.c.l.b16 %v787
      %v809 = vunpack.c.l.b16 %v788
      %v810 = vunpack.c.l.b16 %v789
      %v811 = vunpack.c.l.b16 %v790
      %v812 = vpack.c.b16 %v805, %v804
      %v813 = vpack.c.b16 %v807, %v806
      %v814 = vpack.c.b16 %v809, %v808
      %v815 = vpack.c.b16 %v811, %v810
      %v820 = vunpack.c.l.b16 %v792
      %v821 = vunpack.c.l.b16 %v793
      %v822 = vunpack.c.l.b16 %v794
      %v823 = vunpack.c.l.b16 %v795
      %v824 = vpack.c.b16 %v821, %v820
      %v825 = vpack.c.b16 %v823, %v822
      %v828 = vsel %vm293, %v812, 0
      %v831 = vsel %vm293, %v813, 0
      %v834 = vsel %vm293, %v814, 0
      %v837 = vsel %vm293, %v815, 0
      %v840 = vsel %vm306, %v825, 0
      %842 = vmatprep.subr.bf16.mxu0 0
      %843 = vmatpush1.bf16.msra.mxu0 %v824
      %844 = vmatprep.subr.bf16.mxu0 0
      %845 = vmatpush1.bf16.msra.mxu0 %v840
      %846 = vmatprep.subr.bf16.mxu0 0
      %847 = vmatpush1.bf16.msra.mxu0 0
      %848 = vmatprep.subr.bf16.mxu0 0
      %849 = vmatpush1.bf16.msra.mxu0 0
      %850 = vmatprep.subr.bf16.mxu0 0
      %851 = vmatpush1.bf16.msra.mxu0 0
      %852 = vmatprep.subr.bf16.mxu0 0
      %853 = vmatpush1.bf16.msra.mxu0 0
      %854 = vmatprep.subr.bf16.mxu0 0
      %855 = vmatpush1.bf16.msra.mxu0 0
      %856 = vmatprep.subr.bf16.mxu0 0
      %857 = vmatpush1.bf16.msra.mxu0 0
      %858 = vmatprep.subr.bf16.mxu0 0
      %859 = vmatpush1.bf16.msra.mxu0 0
      %860 = vmatprep.subr.bf16.mxu0 0
      %861 = vmatpush1.bf16.msra.mxu0 0
      %862 = vmatprep.subr.bf16.mxu0 0
      %863 = vmatpush1.bf16.msra.mxu0 0
      %864 = vmatprep.subr.bf16.mxu0 0
      %865 = vmatpush1.bf16.msra.mxu0 0
      %866 = vmatprep.subr.bf16.mxu0 0
      %867 = vmatpush1.bf16.msra.mxu0 0
      %868 = vmatprep.subr.bf16.mxu0 0
      %869 = vmatpush1.bf16.msra.mxu0 0
      %870 = vmatprep.subr.bf16.mxu0 0
      %871 = vmatpush1.bf16.msra.mxu0 0
      %872 = vmatprep.subr.bf16.mxu0 0
      %873 = vmatpush1.bf16.msra.mxu0 0
      %874 = vmatprep.mubr.bf16.mxu0 0
      %875 = vmatmul.mubr.bf16.gmra.mrb[0].mxu0 %v828
      %v876 = vpop.f32.mrb[0].mxu0
      %v877 = vadd.f32 0.0, %v876
      %v878 = vpop.f32.mrb[0].mxu0
      %v879 = vpop.f32.mrb[0].mxu0
      %v880 = vadd.f32 0.0, %v879
      %v881 = vpop.f32.mrb[0].mxu0
      %882 = vmatprep.mubr.bf16.mxu0 0
      %883 = vmatmul.mubr.bf16.gmra.mrb[0].mxu0 %v831
      %v884 = vpop.f32.mrb[0].mxu0
      %v885 = vadd.f32 0.0, %v884
      %v886 = vpop.f32.mrb[0].mxu0
      %v887 = vpop.f32.mrb[0].mxu0
      %v888 = vadd.f32 0.0, %v887
      %v889 = vpop.f32.mrb[0].mxu0
      %890 = vmatprep.mubr.bf16.mxu0 0
      %891 = vmatmul.mubr.bf16.gmra.mrb[0].mxu0 %v834
      %v892 = vpop.f32.mrb[0].mxu0
      %v893 = vadd.f32 0.0, %v892
      %v894 = vpop.f32.mrb[0].mxu0
      %v895 = vpop.f32.mrb[0].mxu0
      %v896 = vadd.f32 0.0, %v895
      %v897 = vpop.f32.mrb[0].mxu0
      %898 = vmatprep.mubr.bf16.mxu0 0
      %899 = vmatmul.mubr.bf16.gmra.mrb[0].mxu0 %v837
      %v900 = vpop.f32.mrb[0].mxu0
      %v901 = vadd.f32 0.0, %v900
      %v902 = vpop.f32.mrb[0].mxu0
      %v903 = vpop.f32.mrb[0].mxu0
      %v904 = vadd.f32 0.0, %v903
      %v905 = vpop.f32.mrb[0].mxu0
      %906 = vdwg.mxu0
      %v907 = vadd.f32 %v774, %v877
      %v908 = vadd.f32 %v775, %v880
      %v909 = vadd.f32 %v776, %v885
      %v910 = vadd.f32 %v777, %v888
      %v911 = vadd.f32 %v778, %v893
      %v912 = vadd.f32 %v779, %v896
      %v913 = vadd.f32 %v780, %v901
      %v914 = vadd.f32 %v781, %v904
      %s915 = scalar_lea.vmem %s230, 48
      %v916 = vld [vmem:[%s915] sm:$0xf]
      %v917 = vld [vmem:[%s915 + $0x4] sm:$0xf]
      %v918 = vld [vmem:[%s915 + $0x8] sm:$0xf]
      %v919 = vld [vmem:[%s915 + $0xc] sm:$0xf]
      %v920 = vld [vmem:[%s915 + $0x10] sm:$0xf]
      %v921 = vld [vmem:[%s915 + $0x14] sm:$0xf]
      %v922 = vld [vmem:[%s915 + $0x18] sm:$0xf]
      %v923 = vld [vmem:[%s915 + $0x1c] sm:$0xf]
      %s924 = scalar_lea.vmem %s1, 48
      %v925 = vld [vmem:[%s924] sm:$0xf]
      %v926 = vld [vmem:[%s924 + $0x4] sm:$0xf]
      %v927 = vld [vmem:[%s924 + $0x8] sm:$0xf]
      %v928 = vld [vmem:[%s924 + $0xc] sm:$0x3]
      %v937 = vunpack.c.l.b16 %v916
      %v938 = vunpack.c.l.b16 %v917
      %v939 = vunpack.c.l.b16 %v918
      %v940 = vunpack.c.l.b16 %v919
      %v941 = vunpack.c.l.b16 %v920
      %v942 = vunpack.c.l.b16 %v921
      %v943 = vunpack.c.l.b16 %v922
      %v944 = vunpack.c.l.b16 %v923
      %v945 = vpack.c.b16 %v938, %v937
      %v946 = vpack.c.b16 %v940, %v939
      %v947 = vpack.c.b16 %v942, %v941
      %v948 = vpack.c.b16 %v944, %v943
      %v953 = vunpack.c.l.b16 %v925
      %v954 = vunpack.c.l.b16 %v926
      %v955 = vunpack.c.l.b16 %v927
      %v956 = vunpack.c.l.b16 %v928
      %v957 = vpack.c.b16 %v954, %v953
      %v958 = vpack.c.b16 %v956, %v955
      %v961 = vsel %vm293, %v945, 0
      %v964 = vsel %vm293, %v946, 0
      %v967 = vsel %vm293, %v947, 0
      %v970 = vsel %vm293, %v948, 0
      %v973 = vsel %vm306, %v958, 0
      %975 = vmatprep.subr.bf16.mxu0 0
      %976 = vmatpush1.bf16.msra.mxu0 %v957
      %977 = vmatprep.subr.bf16.mxu0 0
      %978 = vmatpush1.bf16.msra.mxu0 %v973
      %979 = vmatprep.subr.bf16.mxu0 0
      %980 = vmatpush1.bf16.msra.mxu0 0
      %981 = vmatprep.subr.bf16.mxu0 0
      %982 = vmatpush1.bf16.msra.mxu0 0
      %983 = vmatprep.subr.bf16.mxu0 0
      %984 = vmatpush1.bf16.msra.mxu0 0
      %985 = vmatprep.subr.bf16.mxu0 0
      %986 = vmatpush1.bf16.msra.mxu0 0
      %987 = vmatprep.subr.bf16.mxu0 0
      %988 = vmatpush1.bf16.msra.mxu0 0
      %989 = vmatprep.subr.bf16.mxu0 0
      %990 = vmatpush1.bf16.msra.mxu0 0
      %991 = vmatprep.subr.bf16.mxu0 0
      %992 = vmatpush1.bf16.msra.mxu0 0
      %993 = vmatprep.subr.bf16.mxu0 0
      %994 = vmatpush1.bf16.msra.mxu0 0
      %995 = vmatprep.subr.bf16.mxu0 0
      %996 = vmatpush1.bf16.msra.mxu0 0
      %997 = vmatprep.subr.bf16.mxu0 0
      %998 = vmatpush1.bf16.msra.mxu0 0
      %999 = vmatprep.subr.bf16.mxu0 0
      %1000 = vmatpush1.bf16.msra.mxu0 0
      %1001 = vmatprep.subr.bf16.mxu0 0
      %1002 = vmatpush1.bf16.msra.mxu0 0
      %1003 = vmatprep.subr.bf16.mxu0 0
      %1004 = vmatpush1.bf16.msra.mxu0 0
      %1005 = vmatprep.subr.bf16.mxu0 0
      %1006 = vmatpush1.bf16.msra.mxu0 0
      %1007 = vmatprep.mubr.bf16.mxu0 0
      %1008 = vmatmul.mubr.bf16.gmra.mrb[0].mxu0 %v961
      %v1009 = vpop.f32.mrb[0].mxu0
      %v1010 = vadd.f32 0.0, %v1009
      %v1011 = vpop.f32.mrb[0].mxu0
      %v1012 = vpop.f32.mrb[0].mxu0
      %v1013 = vadd.f32 0.0, %v1012
      %v1014 = vpop.f32.mrb[0].mxu0
      %1015 = vmatprep.mubr.bf16.mxu0 0
      %1016 = vmatmul.mubr.bf16.gmra.mrb[0].mxu0 %v964
      %v1017 = vpop.f32.mrb[0].mxu0
      %v1018 = vadd.f32 0.0, %v1017
      %v1019 = vpop.f32.mrb[0].mxu0
      %v1020 = vpop.f32.mrb[0].mxu0
      %v1021 = vadd.f32 0.0, %v1020
      %v1022 = vpop.f32.mrb[0].mxu0
      %1023 = vmatprep.mubr.bf16.mxu0 0
      %1024 = vmatmul.mubr.bf16.gmra.mrb[0].mxu0 %v967
      %v1025 = vpop.f32.mrb[0].mxu0
      %v1026 = vadd.f32 0.0, %v1025
      %v1027 = vpop.f32.mrb[0].mxu0
      %v1028 = vpop.f32.mrb[0].mxu0
      %v1029 = vadd.f32 0.0, %v1028
      %v1030 = vpop.f32.mrb[0].mxu0
      %1031 = vmatprep.mubr.bf16.mxu0 0
      %1032 = vmatmul.mubr.bf16.gmra.mrb[0].mxu0 %v970
      %v1033 = vpop.f32.mrb[0].mxu0
      %v1034 = vadd.f32 0.0, %v1033
      %v1035 = vpop.f32.mrb[0].mxu0
      %v1036 = vpop.f32.mrb[0].mxu0
      %v1037 = vadd.f32 0.0, %v1036
      %v1038 = vpop.f32.mrb[0].mxu0
      %1039 = vdwg.mxu0
      %v1040 = vadd.f32 %v907, %v1010
      %v1041 = vadd.f32 %v908, %v1013
      %v1042 = vadd.f32 %v909, %v1018
      %v1043 = vadd.f32 %v910, %v1021
      %v1044 = vadd.f32 %v911, %v1026
      %v1045 = vadd.f32 %v912, %v1029
      %v1046 = vadd.f32 %v913, %v1034
      %v1047 = vadd.f32 %v914, %v1037
      %s1048 = scalar_lea.vmem %s230, 52
      %v1049 = vld [vmem:[%s1048] sm:$0xf]
      %v1050 = vld [vmem:[%s1048 + $0x4] sm:$0xf]
      %v1051 = vld [vmem:[%s1048 + $0x8] sm:$0xf]
      %v1052 = vld [vmem:[%s1048 + $0xc] sm:$0xf]
      %v1053 = vld [vmem:[%s1048 + $0x10] sm:$0xf]
      %v1054 = vld [vmem:[%s1048 + $0x14] sm:$0xf]
      %v1055 = vld [vmem:[%s1048 + $0x18] sm:$0xf]
      %v1056 = vld [vmem:[%s1048 + $0x1c] sm:$0xf]
      %s1057 = scalar_lea.vmem %s1, 80
      %v1058 = vld [vmem:[%s1057] sm:$0xf]
      %v1059 = vld [vmem:[%s1057 + $0x4] sm:$0xf]
      %v1060 = vld [vmem:[%s1057 + $0x8] sm:$0xf]
      %v1061 = vld [vmem:[%s1057 + $0xc] sm:$0x3]
      %v1070 = vunpack.c.l.b16 %v1049
      %v1071 = vunpack.c.l.b16 %v1050
      %v1072 = vunpack.c.l.b16 %v1051
      %v1073 = vunpack.c.l.b16 %v1052
      %v1074 = vunpack.c.l.b16 %v1053
      %v1075 = vunpack.c.l.b16 %v1054
      %v1076 = vunpack.c.l.b16 %v1055
      %v1077 = vunpack.c.l.b16 %v1056
      %v1078 = vpack.c.b16 %v1071, %v1070
      %v1079 = vpack.c.b16 %v1073, %v1072
      %v1080 = vpack.c.b16 %v1075, %v1074
      %v1081 = vpack.c.b16 %v1077, %v1076
      %v1086 = vunpack.c.l.b16 %v1058
      %v1087 = vunpack.c.l.b16 %v1059
      %v1088 = vunpack.c.l.b16 %v1060
      %v1089 = vunpack.c.l.b16 %v1061
      %v1090 = vpack.c.b16 %v1087, %v1086
      %v1091 = vpack.c.b16 %v1089, %v1088
      %v1094 = vsel %vm293, %v1078, 0
      %v1097 = vsel %vm293, %v1079, 0
      %v1100 = vsel %vm293, %v1080, 0
      %v1103 = vsel %vm293, %v1081, 0
      %v1106 = vsel %vm306, %v1091, 0
      %1108 = vmatprep.subr.bf16.mxu0 0
      %1109 = vmatpush1.bf16.msra.mxu0 %v1090
      %1110 = vmatprep.subr.bf16.mxu0 0
      %1111 = vmatpush1.bf16.msra.mxu0 %v1106
      %1112 = vmatprep.subr.bf16.mxu0 0
      %1113 = vmatpush1.bf16.msra.mxu0 0
      %1114 = vmatprep.subr.bf16.mxu0 0
      %1115 = vmatpush1.bf16.msra.mxu0 0
      %1116 = vmatprep.subr.bf16.mxu0 0
      %1117 = vmatpush1.bf16.msra.mxu0 0
      %1118 = vmatprep.subr.bf16.mxu0 0
      %1119 = vmatpush1.bf16.msra.mxu0 0
      %1120 = vmatprep.subr.bf16.mxu0 0
      %1121 = vmatpush1.bf16.msra.mxu0 0
      %1122 = vmatprep.subr.bf16.mxu0 0
      %1123 = vmatpush1.bf16.msra.mxu0 0
      %1124 = vmatprep.subr.bf16.mxu0 0
      %1125 = vmatpush1.bf16.msra.mxu0 0
      %1126 = vmatprep.subr.bf16.mxu0 0
      %1127 = vmatpush1.bf16.msra.mxu0 0
      %1128 = vmatprep.subr.bf16.mxu0 0
      %1129 = vmatpush1.bf16.msra.mxu0 0
      %1130 = vmatprep.subr.bf16.mxu0 0
      %1131 = vmatpush1.bf16.msra.mxu0 0
      %1132 = vmatprep.subr.bf16.mxu0 0
      %1133 = vmatpush1.bf16.msra.mxu0 0
      %1134 = vmatprep.subr.bf16.mxu0 0
      %1135 = vmatpush1.bf16.msra.mxu0 0
      %1136 = vmatprep.subr.bf16.mxu0 0
      %1137 = vmatpush1.bf16.msra.mxu0 0
      %1138 = vmatprep.subr.bf16.mxu0 0
      %1139 = vmatpush1.bf16.msra.mxu0 0
      %1140 = vmatprep.mubr.bf16.mxu0 0
      %1141 = vmatmul.mubr.bf16.gmra.mrb[0].mxu0 %v1094
      %v1142 = vpop.f32.mrb[0].mxu0
      %v1143 = vadd.f32 0.0, %v1142
      %v1144 = vpop.f32.mrb[0].mxu0
      %v1145 = vpop.f32.mrb[0].mxu0
      %v1146 = vadd.f32 0.0, %v1145
      %v1147 = vpop.f32.mrb[0].mxu0
      %1148 = vmatprep.mubr.bf16.mxu0 0
      %1149 = vmatmul.mubr.bf16.gmra.mrb[0].mxu0 %v1097
      %v1150 = vpop.f32.mrb[0].mxu0
      %v1151 = vadd.f32 0.0, %v1150
      %v1152 = vpop.f32.mrb[0].mxu0
      %v1153 = vpop.f32.mrb[0].mxu0
      %v1154 = vadd.f32 0.0, %v1153
      %v1155 = vpop.f32.mrb[0].mxu0
      %1156 = vmatprep.mubr.bf16.mxu0 0
      %1157 = vmatmul.mubr.bf16.gmra.mrb[0].mxu0 %v1100
      %v1158 = vpop.f32.mrb[0].mxu0
      %v1159 = vadd.f32 0.0, %v1158
      %v1160 = vpop.f32.mrb[0].mxu0
      %v1161 = vpop.f32.mrb[0].mxu0
      %v1162 = vadd.f32 0.0, %v1161
      %v1163 = vpop.f32.mrb[0].mxu0
      %1164 = vmatprep.mubr.bf16.mxu0 0
      %1165 = vmatmul.mubr.bf16.gmra.mrb[0].mxu0 %v1103
      %v1166 = vpop.f32.mrb[0].mxu0
      %v1167 = vadd.f32 0.0, %v1166
      %v1168 = vpop.f32.mrb[0].mxu0
      %v1169 = vpop.f32.mrb[0].mxu0
      %v1170 = vadd.f32 0.0, %v1169
      %v1171 = vpop.f32.mrb[0].mxu0
      %1172 = vdwg.mxu0
      %v1173 = vadd.f32 %v1040, %v1143
      %v1174 = vadd.f32 %v1041, %v1146
      %v1175 = vadd.f32 %v1042, %v1151
      %v1176 = vadd.f32 %v1043, %v1154
      %v1177 = vadd.f32 %v1044, %v1159
      %v1178 = vadd.f32 %v1045, %v1162
      %v1179 = vadd.f32 %v1046, %v1167
      %v1180 = vadd.f32 %v1047, %v1170
      %vm1181 = vcmp.gt.f32.partialorder %v1173, 0.0
      %vm1182 = vcmp.gt.f32.partialorder %v1174, 0.0
      %vm1183 = vcmp.gt.f32.partialorder %v1175, 0.0
      %vm1184 = vcmp.gt.f32.partialorder %v1176, 0.0
      %vm1185 = vcmp.gt.f32.partialorder %v1177, 0.0
      %vm1186 = vcmp.gt.f32.partialorder %v1178, 0.0
      %vm1187 = vcmp.gt.f32.partialorder %v1179, 0.0
      %vm1188 = vcmp.gt.f32.partialorder %v1180, 0.0
      %v1189 = vmin.f32 %v1173, 0.0
      %v1190 = vmin.f32 %v1174, 0.0
      %v1191 = vmin.f32 %v1175, 0.0
      %v1192 = vmin.f32 %v1176, 0.0
      %v1193 = vmin.f32 %v1177, 0.0
      %v1194 = vmin.f32 %v1178, 0.0
      %v1195 = vmin.f32 %v1179, 0.0
      %v1196 = vmin.f32 %v1180, 0.0
      %v1197 = vmul.f32 %v1189, 1.442695
      %v1198 = vpow.pop %v1197
      %v1199 = vmul.f32 %v1190, 1.442695
      %v1200 = vpow.pop %v1199
      %v1201 = vmul.f32 %v1191, 1.442695
      %v1202 = vpow.pop %v1201
      %v1203 = vmul.f32 %v1192, 1.442695
      %v1204 = vpow.pop %v1203
      %v1205 = vmul.f32 %v1193, 1.442695
      %v1206 = vpow.pop %v1205
      %v1207 = vmul.f32 %v1194, 1.442695
      %v1208 = vpow.pop %v1207
      %v1209 = vmul.f32 %v1195, 1.442695
      %v1210 = vpow.pop %v1209
      %v1211 = vmul.f32 %v1196, 1.442695
      %v1212 = vpow.pop %v1211
      %v1213 = vsub.f32 %v1198, 1.0
      %v1214 = vsub.f32 %v1200, 1.0
      %v1215 = vsub.f32 %v1202, 1.0
      %v1216 = vsub.f32 %v1204, 1.0
      %v1217 = vsub.f32 %v1206, 1.0
      %v1218 = vsub.f32 %v1208, 1.0
      %v1219 = vsub.f32 %v1210, 1.0
      %v1220 = vsub.f32 %v1212, 1.0
      %v1221 = vsel %vm1181, %v1173, %v1213
      %v1222 = vsel %vm1182, %v1174, %v1214
      %v1223 = vsel %vm1183, %v1175, %v1215
      %v1224 = vsel %vm1184, %v1176, %v1216
      %v1225 = vsel %vm1185, %v1177, %v1217
      %v1226 = vsel %vm1186, %v1178, %v1218
      %v1227 = vsel %vm1187, %v1179, %v1219
      %v1228 = vsel %vm1188, %v1180, %v1220
      %v1229 = vpack.c.bf16 %v1222, %v1221
      %v1230 = vpack.c.bf16 %v1224, %v1223
      %v1231 = vpack.c.bf16 %v1226, %v1225
      %v1232 = vpack.c.bf16 %v1228, %v1227
      %v1233 = vunpack.c.l.bf16 %v1229
      %v1234 = vunpack.c.h.bf16 %v1229
      %v1235 = vunpack.c.l.bf16 %v1230
      %v1236 = vunpack.c.h.bf16 %v1230
      %v1237 = vunpack.c.l.bf16 %v1231
      %v1238 = vunpack.c.h.bf16 %v1231
      %v1239 = vunpack.c.l.bf16 %v1232
      %v1240 = vunpack.c.h.bf16 %v1232
      %vm1241 = vcmask 64512
      %v1242 = vsel %vm1241, %v1233, 0.0
      %v1243 = vsel %vm1241, %v1234, 0.0
      %v1244 = vadd.f32 %v1242, %v1243
      %v1245 = vsel %vm1241, %v1235, 0.0
      %v1246 = vadd.f32 %v1244, %v1245
      %v1247 = vsel %vm1241, %v1236, 0.0
      %v1248 = vadd.f32 %v1246, %v1247
      %v1249 = vsel %vm1241, %v1237, 0.0
      %v1250 = vadd.f32 %v1248, %v1249
      %v1251 = vsel %vm1241, %v1238, 0.0
      %v1252 = vadd.f32 %v1250, %v1251
      %v1253 = vsel %vm1241, %v1239, 0.0
      %v1254 = vadd.f32 %v1252, %v1253
      %v1255 = vsel %vm1241, %v1240, 0.0
      %v1256 = vadd.f32 %v1254, %v1255
      %v1257 = vrot.slane %v1256, 4
      %v1258 = vadd.f32 %v1256, %v1257
      %v1259 = vrot.slane %v1258, 2
      %v1260 = vadd.f32 %v1258, %v1259
      %v1261 = vrot.slane %v1260, 1
      %v1262 = vadd.f32 %v1260, %v1261
      %v1263 = vadd.f32 %v1262, 0.0
      %v1264 = vmul.f32 %v1233, %v1233
      %v1265 = vmul.f32 %v1234, %v1234
      %v1266 = vmul.f32 %v1235, %v1235
      %v1267 = vmul.f32 %v1236, %v1236
      %v1268 = vmul.f32 %v1237, %v1237
      %v1269 = vmul.f32 %v1238, %v1238
      %v1270 = vmul.f32 %v1239, %v1239
      %v1271 = vmul.f32 %v1240, %v1240
      %v1272 = vsel %vm1241, %v1264, 0.0
      %v1273 = vsel %vm1241, %v1265, 0.0
      %v1274 = vadd.f32 %v1272, %v1273
      %v1275 = vsel %vm1241, %v1266, 0.0
      %v1276 = vadd.f32 %v1274, %v1275
      %v1277 = vsel %vm1241, %v1267, 0.0
      %v1278 = vadd.f32 %v1276, %v1277
      %v1279 = vsel %vm1241, %v1268, 0.0
      %v1280 = vadd.f32 %v1278, %v1279
      %v1281 = vsel %vm1241, %v1269, 0.0
      %v1282 = vadd.f32 %v1280, %v1281
      %v1283 = vsel %vm1241, %v1270, 0.0
      %v1284 = vadd.f32 %v1282, %v1283
      %v1285 = vsel %vm1241, %v1271, 0.0
      %v1286 = vadd.f32 %v1284, %v1285
      %v1287 = vrot.slane %v1286, 4
      %v1288 = vadd.f32 %v1286, %v1287
      %v1289 = vrot.slane %v1288, 2
      %v1290 = vadd.f32 %v1288, %v1289
      %v1291 = vrot.slane %v1290, 1
      %v1292 = vadd.f32 %v1290, %v1291
      %v1293 = vadd.f32 %v1292, 0.0
      %v1298 = vunpack.c.l.b16 %v1229
      %v1299 = vunpack.c.h.b16 %v1229
      %v1300 = vunpack.c.l.b16 %v1230
      %v1301 = vunpack.c.h.b16 %v1230
      %v1302 = vunpack.c.l.b16 %v1231
      %v1303 = vunpack.c.h.b16 %v1231
      %v1304 = vunpack.c.l.b16 %v1232
      %v1305 = vunpack.c.h.b16 %v1232
      %v1306 = vpack.c.b16 %v1298, %v1298
      %v1307 = vpack.c.b16 %v1299, %v1299
      %v1308 = vpack.c.b16 %v1300, %v1300
      %v1309 = vpack.c.b16 %v1301, %v1301
      %v1310 = vpack.c.b16 %v1302, %v1302
      %v1311 = vpack.c.b16 %v1303, %v1303
      %v1312 = vpack.c.b16 %v1304, %v1304
      %v1313 = vpack.c.b16 %v1305, %v1305
      %vm1322 = vcmask 60416
      %1323 = vst.msk [vmem:[%s235] sm:$0xf] %vm1322, %v1306
      %1324 = vst.msk [vmem:[%s235 + $0x4] sm:$0xf] %vm1322, %v1307
      %1325 = vst.msk [vmem:[%s235 + $0x8] sm:$0xf] %vm1322, %v1308
      %1326 = vst.msk [vmem:[%s235 + $0xc] sm:$0xf] %vm1322, %v1309
      %1327 = vst.msk [vmem:[%s235 + $0x10] sm:$0xf] %vm1322, %v1310
      %1328 = vst.msk [vmem:[%s235 + $0x14] sm:$0xf] %vm1322, %v1311
      %1329 = vst.msk [vmem:[%s235 + $0x18] sm:$0xf] %vm1322, %v1312
      %1330 = vst.msk [vmem:[%s235 + $0x1c] sm:$0xf] %vm1322, %v1313
      %vm1331 = vcmask 57344
      %1332 = vst.msk [vmem:[%s238] sm:$0x1] %vm1331, %v1263
      %1333 = vst.msk [vmem:[%s241] sm:$0x1] %vm1331, %v1293
      %p1334 = scmp.lt.s32.totalorder %s17, 1
      %s1335 = scalar_select %p1334, %s17, 1
      %s1336 = smul.addr %s1335, 8
      %s1337 = smul.addr %s1336, 4
      %s1338 = scalar_lea.vmem %s3, %s1337
      %p1339 = scmp.lt.s32.totalorder %s17, 1
      %s1340 = scalar_select %p1339, %s17, 1
      %s1341 = scalar_lea.vmem %s4, %s1340
      %p1342 = scmp.lt.s32.totalorder %s17, 1
      %s1343 = scalar_select %p1342, %s17, 1
      %s1344 = scalar_lea.vmem %s5, %s1343
      // Predicated region
      $region33: #{conv_block_forward.2} parent=31 // pred_check
        %p1345 = pneg %p103
      $region34: #{conv_block_forward.2} parent=31 // pred_check_branch
        %1347 = sbr.rel (%p1345) target = $region36
      $region35: #{conv_block_forward.2} parent=31 // pred_region
        _
      $region36: #{conv_block_forward.2} parent=31 // pred_fallthru
        _
      // Predicated region
      $region37: #{conv_block_forward.2} parent=31 // pred_check
        %p1348 = pneg %p129
      $region38: #{conv_block_forward.2} parent=31 // pred_check_branch
        %1350 = sbr.rel (%p1348) target = $region40
      $region39: #{conv_block_forward.2} parent=31 // pred_region
        _
      $region40: #{conv_block_forward.2} parent=31 // pred_fallthru
        _
      // Predicated region
      $region41: #{conv_block_forward.2} parent=31 // pred_check
        %p1351 = pneg %p155
      $region42: #{conv_block_forward.2} parent=31 // pred_check_branch
        %1353 = sbr.rel (%p1351) target = $region44
      $region43: #{conv_block_forward.2} parent=31 // pred_region
        _
      $region44: #{conv_block_forward.2} parent=31 // pred_fallthru
        _
    $region32: #{conv_block_forward.2} parent=5 // pred_fallthru
      _
    %p1354 = scmp.le.s32.totalorder 2, %s12
    // Predicated region
    $region45: #{conv_block_forward.2} parent=5 // pred_check
      %p1355 = pneg %p1354
    $region46: #{conv_block_forward.2} parent=5 // pred_check_branch
      %1357 = sbr.rel (%p1355) target = $region48
    $region47: #{conv_block_forward.2} parent=5 // pred_region
      %s1358 = ssub.s32 %s12, 2
      // Predicated region
      $region49: #{conv_block_forward.2} parent=47 // pred_check
        %p1359 = pneg %p109
      $region50: #{conv_block_forward.2} parent=47 // pred_check_branch
        %1361 = sbr.rel (%p1359) target = $region52
      $region51: #{conv_block_forward.2} parent=47 // pred_region
        %p1362 = scmp.lt.s32.totalorder %s18, 1
        %s1363 = scalar_select %p1362, %s18, 1
        %s1364 = smul.addr %s1363, 8
        %s1365 = smul.addr %s1364, 4
        %s1366 = scalar_lea.vmem %s3, %s1365
      $region52: #{conv_block_forward.2} parent=47 // pred_fallthru
        _
      // Predicated region
      $region53: #{conv_block_forward.2} parent=47 // pred_check
        %p1367 = pneg %p135
      $region54: #{conv_block_forward.2} parent=47 // pred_check_branch
        %1369 = sbr.rel (%p1367) target = $region56
      $region55: #{conv_block_forward.2} parent=47 // pred_region
        %p1370 = scmp.lt.s32.totalorder %s18, 1
        %s1371 = scalar_select %p1370, %s18, 1
        %s1372 = scalar_lea.vmem %s4, %s1371
      $region56: #{conv_block_forward.2} parent=47 // pred_fallthru
        _
      // Predicated region
      $region57: #{conv_block_forward.2} parent=47 // pred_check
        %p1373 = pneg %p161
      $region58: #{conv_block_forward.2} parent=47 // pred_check_branch
        %1375 = sbr.rel (%p1373) target = $region60
      $region59: #{conv_block_forward.2} parent=47 // pred_region
        %p1376 = scmp.lt.s32.totalorder %s18, 1
        %s1377 = scalar_select %p1376, %s18, 1
        %s1378 = scalar_lea.vmem %s5, %s1377
      $region60: #{conv_block_forward.2} parent=47 // pred_fallthru
        _
    $region48: #{conv_block_forward.2} parent=5 // pred_fallthru
      _
  $region6: #{conv_block_forward.2} parent=0 // loop_footer
    %s16 = sadd.s32 1, %s12
  $region7: #{conv_block_forward.2} parent=0 // loop_footer_branch
    %11 = sbr.rel target = $region3
  $region8: #{conv_block_forward.2} parent=0 // loop_exit
    _

</llo_original>
